<compile_context>
chip_gen: v5e
topology: v5e:2x2
jax: 0.10.0
libtpu: 0.0.40
codegen_flags: <defaults>
</compile_context>

<pallas_src>
import jax
import jax.numpy as jnp
from jax.experimental import pallas as pl
from jax.experimental.pallas import tpu as pltpu

NEG_SLOPE = 0.2     # GATv2 LeakyReLU slope
LN_EPS = 1e-5
NEG = -1e30         # finite "-inf" so 0 * NEG and NEG - NEG stay finite


def _rep_heads(a, H, D):
    """(R, H) -> (R, H*D): replicate each head column across its D lanes."""
    R = a.shape[0]
    return jnp.concatenate(
        [jnp.broadcast_to(a[:, h:h + 1], (R, D)) for h in range(H)], axis=1)


# ------------------------------ Pallas kernel ------------------------------- #
def node_aggr_kernel(
    idxr_ref,   # (1, TN)  int32   segment id per source node (row form), -1 = pad
    idxc_ref,   # (TN, 1)  int32   same index, column form
    x_ref,      # (TN, D)  bf16    source-node features
    wl_ref,     # (D, HD)  bf16    GATv2 lin_l weight
    bl_ref,     # (1, HD)  f32     lin_l bias (value path)
    blr_ref,    # (1, HD)  f32     lin_l bias + lin_r(pool embedding) (score path)
    attn_ref,   # (HD, H)  bf16    narrow per-head attention matrix
    bgat_ref,   # (1, HD)  f32     GATv2 output bias
    w1_ref,     # (HD, HD) bf16    MLP layer-1 weight
    b1_ref,     # (1, HD)  f32
    g_ref,      # (1, HD)  f32     LayerNorm scale
    be_ref,     # (1, HD)  f32     LayerNorm shift
    w2_ref,     # (HD, D)  bf16    MLP layer-2 weight
    b2_ref,     # (1, D)   f32
    out_ref,    # (TP, D)  f32
    m_acc,      # (TP, H)  f32  running per-segment per-head max (narrow)
    den_acc,    # (TP, HD) f32  running sum of exp(logit - m)   (head-replicated)
    num_acc,    # (TP, HD) f32  running sum of exp(logit - m) * xl
):
    f32 = jnp.float32
    bf16 = jnp.bfloat16
    TN, D = x_ref.shape
    HD = wl_ref.shape[1]
    H = HD // D
    TP = out_ref.shape[0]

    n = pl.program_id(1)
    p_start = pl.program_id(0) * TP

    @pl.when(n == 0)
    def _init():
        m_acc[...] = jnp.full(m_acc.shape, NEG, f32)
        den_acc[...] = jnp.zeros(den_acc.shape, f32)
        num_acc[...] = jnp.zeros(num_acc.shape, f32)

    # ---- GATv2 source-side transform (bf16 MXU operands, f32 accumulation) ----
    base = jnp.dot(x_ref[...], wl_ref[...], preferred_element_type=f32)      # (TN, HD)
    xl = base + bl_ref[...]                                                  # value path
    s = base + blr_ref[...]                                                  # score path (bl + lin_r(emb))
    s = jnp.where(s > 0, s, NEG_SLOPE * s)                                   # LeakyReLU
    # narrow per-head logits: logits[:, h] == <s_h, att_h>
    logits = jnp.dot(s.astype(bf16), attn_ref[...], preferred_element_type=f32)  # (TN, H)

    # ---- scatter / gather masks rebuilt in-kernel from the int32 index ----
    idx_r = idxr_ref[...]                                                    # (1, TN)
    idx_c = idxc_ref[...]                                                    # (TN, 1)
    pool_r = jax.lax.broadcasted_iota(jnp.int32, (TP, TN), 0) + p_start
    pool_c = jax.lax.broadcasted_iota(jnp.int32, (TN, TP), 1) + p_start
    mask_b = pool_r == idx_r                                                 # (TP, TN)
    maskT_b = pool_c == idx_c                                                # (TN, TP)
    mask = mask_b.astype(bf16)
    maskT = maskT_b.astype(f32)
    valid = (idx_c >= p_start) & (idx_c < p_start + TP)                      # (TN, 1)

    # ---- tile-local per-segment per-head max, narrow (TP, H) ----
    rep_t = logits.T                                                         # (H, TN)
    t_cols = [jnp.max(jnp.where(mask_b, rep_t[h:h + 1, :], NEG),
                      axis=1, keepdims=True)                                 # (TP, 1)
              for h in range(H)]
    t_m = jnp.concatenate(t_cols, axis=1)                                    # (TP, H)

    # ---- online (flash-style) segment softmax accumulation ----
    m_old = m_acc[...]                                                       # (TP, H)
    m_new = jnp.maximum(m_old, t_m)
    alpha = _rep_heads(jnp.exp(m_old - m_new), H, D)                         # (TP, HD)
    # gather each source node's segment max (0/1 rows select exactly one segment;
    # f32 matmul so the gathered max matches m_new bit-exactly)
    m_g = jnp.dot(maskT, m_new, preferred_element_type=f32)                  # (TN, H)
    p = jnp.exp(jnp.where(valid, logits - m_g, NEG))                         # (TN, H), <= 1
    p_rep = _rep_heads(p, H, D)                                              # (TN, HD)
    # single fused lane-dense scatter matmul: [numerator | denominator] at once
    cat = jnp.concatenate([xl * p_rep, p_rep], axis=1).astype(bf16)          # (TN, 2*HD)
    contrib = jnp.dot(mask, cat, preferred_element_type=f32)                 # (TP, 2*HD)
    num_acc[...] = num_acc[...] * alpha + contrib[:, :HD]
    den_acc[...] = den_acc[...] * alpha + contrib[:, HD:]
    m_acc[...] = m_new

    # ---- finalize: normalize + MLP (Linear -> LayerNorm -> GELU -> Linear) ----
    @pl.when(n == pl.num_programs(1) - 1)
    def _finalize():
        den = den_acc[...]
        has = den > 0                      # exact: a segment's max edge contributes exp(0) == 1
        inv = pl.reciprocal(jnp.where(has, den, 1.0), approx=True)
        y = jnp.where(has, num_acc[...] * inv, 0.0) + bgat_ref[...]          # (TP, HD)
        h1 = jnp.dot(y.astype(bf16), w1_ref[...], preferred_element_type=f32) + b1_ref[...]
        mu = jnp.mean(h1, axis=-1, keepdims=True)
        var = jnp.mean((h1 - mu) * (h1 - mu), axis=-1, keepdims=True)
        h1 = (h1 - mu) * jax.lax.rsqrt(var + LN_EPS) * g_ref[...] + be_ref[...]
        h1 = jax.nn.gelu(h1)
        out = jnp.dot(h1.astype(bf16), w2_ref[...], preferred_element_type=f32) + b2_ref[...]
        out_ref[...] = out.astype(out_ref.dtype)


# --------------------------------- wrapper ----------------------------------- #
def _round_up(a, b):
    return (a + b - 1) // b * b


def node_aggr_forward(x, index, dim_size, params, *, tile_n=128, tile_p=128):
    """x: (N, hidden) f32; index: (N,) int32 pool-node id per source node."""
    N, D = x.shape
    H = params["att"].shape[0]
    HD = H * D
    P = int(dim_size)

    # Tile sizes respecting the (8, 128) block constraints.
    if N <= tile_n:
        tn = _round_up(max(N, 8), 8)          # single N tile == full (padded) axis
    else:
        tn = _round_up(tile_n, 128)           # multi-tile lane axis must be 128-aligned
    N_pad = _round_up(N, tn)
    tp = min(_round_up(tile_p, 8), _round_up(P, 8))
    P_pad = _round_up(P, tp)

    # Glue (plain JAX): padding, dtype casts, parameter folding.
    f32, bf16, i32 = jnp.float32, jnp.bfloat16, jnp.int32
    x_pad = jnp.zeros((N_pad, D), bf16).at[:N].set(x.astype(bf16))
    idx = jnp.full((N_pad,), -1, i32).at[:N].set(index.astype(i32))
    idx_row = idx.reshape(1, N_pad)
    idx_col = idx.reshape(N_pad, 1)

    # Narrow per-head attention matrix: att_nar[h*D + d, h] = att[h, d].
    eye_h = jnp.eye(H, dtype=f32)
    att_nar = (params["att"][:, :, None] * eye_h[:, None, :]).reshape(HD, H).astype(bf16)
    r = params["emb"] @ params["wr"] + params["br"][None, :]                 # lin_r(emb[0]) -> (1, HD)
    bl = params["bl"][None, :].astype(f32)
    blr = (bl + r).astype(f32)                                               # folded score-path bias

    operands = [
        idx_row, idx_col, x_pad,
        params["wl"].astype(bf16), bl, blr, att_nar,
        params["bgat"][None, :].astype(f32),
        params["w1"].astype(bf16), params["b1"][None, :].astype(f32),
        params["gamma"][None, :].astype(f32), params["beta"][None, :].astype(f32),
        params["w2"].astype(bf16), params["b2"][None, :].astype(f32),
    ]

    def resident(shape):
        # Weights: constant block index -> fetched once, stay VMEM-resident.
        return pl.BlockSpec(shape, lambda p, n: (0,) * len(shape))

    in_specs = [
        pl.BlockSpec((1, tn), lambda p, n: (0, n)),      # idx_row
        pl.BlockSpec((tn, 1), lambda p, n: (n, 0)),      # idx_col
        pl.BlockSpec((tn, D), lambda p, n: (n, 0)),      # x
    ] + [resident(op.shape) for op in operands[3:]]

    grid = (P_pad // tp, N_pad // tn)

    out = pl.pallas_call(
        node_aggr_kernel,
        out_shape=jax.ShapeDtypeStruct((P_pad, D), jnp.float32),
        grid_spec=pltpu.PrefetchScalarGridSpec(
            num_scalar_prefetch=0,
            grid=grid,
            in_specs=in_specs,
            out_specs=pl.BlockSpec((tp, D), lambda p, n: (p, 0)),
            scratch_shapes=[
                pltpu.VMEM((tp, H), jnp.float32),     # m_acc (narrow)
                pltpu.VMEM((tp, HD), jnp.float32),    # den_acc
                pltpu.VMEM((tp, HD), jnp.float32),    # num_acc
            ],
        ),
        compiler_params=pltpu.CompilerParams(
            # P tiles shard across TensorCores (v7x); N is the reduction axis.
            dimension_semantics=("parallel", "arbitrary"),
            vmem_limit_bytes=32 * 1024 * 1024,
        ),
    )(*operands)
    return out[:P]


# ----------------------------- pure-JAX reference ----------------------------- #
def node_aggr_reference(x, index, dim_size, params):
    N, D = x.shape
    H = params["att"].shape[0]
    HD = H * D
    P = int(dim_size)

    xl = x @ params["wl"] + params["bl"]                                 # (N, HD)
    r = params["emb"] @ params["wr"] + params["br"][None, :]             # (1, HD)
    s = xl + r
    s = jnp.where(s > 0, s, NEG_SLOPE * s)
    logits = (s.reshape(N, H, D) * params["att"][None]).sum(-1)          # (N, H)

    seg_max = jax.ops.segment_max(logits, index, num_segments=P)         # (P, H)
    p = jnp.exp(logits - seg_max[index])
    denom = jax.ops.segment_sum(p, index, num_segments=P)                # (P, H)
    msg = xl.reshape(N, H, D) * p[:, :, None]                            # (N, H, D)
    numer = jax.ops.segment_sum(msg, index, num_segments=P)              # (P, H, D)
    y = (numer / denom[:, :, None]).reshape(P, HD) + params["bgat"]

    h = y @ params["w1"] + params["b1"]
    mean = h.mean(-1, keepdims=True)
    var = ((h - mean) ** 2).mean(-1, keepdims=True)
    h = (h - mean) * jax.lax.rsqrt(var + LN_EPS) * params["gamma"] + params["beta"]
    h = jax.nn.gelu(h)
    return h @ params["w2"] + params["b2"]


# ------------------------------------ main ------------------------------------ #
if __name__ == "__main__":
    hidden_dim, num_heads = 32, 4          # n_mlp_layers=2, normalize=LayerNorm, activation=GELU
    D, H = hidden_dim, num_heads
    HD = H * D
    N, P = 256, 16                         # 2 N-tiles x 2 P-tiles with (tile_n=128, tile_p=8)

    keys = jax.random.split(jax.random.PRNGKey(0), 13)
    params = {
        "emb":  jax.random.normal(keys[0], (1, D), jnp.float32),
        "wl":   0.1 * jax.random.normal(keys[1], (D, HD), jnp.float32),
        "bl":   0.1 * jax.random.normal(keys[2], (HD,), jnp.float32),
        "wr":   0.1 * jax.random.normal(keys[3], (D, HD), jnp.float32),
        "br":   0.1 * jax.random.normal(keys[4], (HD,), jnp.float32),
        "att":  0.1 * jax.random.normal(keys[5], (H, D), jnp.float32),
        "bgat": 0.1 * jax.random.normal(keys[6], (HD,), jnp.float32),
        "w1":   0.1 * jax.random.normal(keys[7], (HD, HD), jnp.float32),
        "b1":   0.1 * jax.random.normal(keys[8], (HD,), jnp.float32),
        "gamma": jnp.ones((HD,), jnp.float32),
        "beta":  jnp.zeros((HD,), jnp.float32),
        "w2":   0.1 * jax.random.normal(keys[9], (HD, D), jnp.float32),
        "b2":   0.1 * jax.random.normal(keys[10], (D,), jnp.float32),
    }

    x = jax.random.normal(keys[11], (N, D), jnp.float32)
    index = jax.random.randint(keys[12], (N,), 0, P, dtype=jnp.int32)
    index = index.at[:P].set(jnp.arange(P, dtype=jnp.int32))   # every pool node has >= 1 edge

    out = node_aggr_forward(x, index, P, params, tile_n=128, tile_p=8)
    out = jax.block_until_ready(out)

    ref = node_aggr_reference(x, index, P, params)
    assert out.shape == (P, D), out.shape
    # Tolerance reflects bf16 MXU operands (f32 accumulation) in the kernel vs f32 reference.
    assert jnp.allclose(out, ref, rtol=5e-2, atol=5e-2), float(jnp.max(jnp.abs(out - ref)))

    print("KERNEL_OK")
</pallas_src>

<mosaic_0001>
module attributes {stable_mosaic.version = 11 : i64} {
  func.func @node_aggr_kernel(%arg0: i32, %arg1: i32, %arg2: memref<1x128xi32, #tpu.memory_space<vmem>>, %arg3: memref<128x1xi32, #tpu.memory_space<vmem>>, %arg4: memref<128x32xbf16, #tpu.memory_space<vmem>>, %arg5: memref<32x128xbf16, #tpu.memory_space<vmem>>, %arg6: memref<1x128xf32, #tpu.memory_space<vmem>>, %arg7: memref<1x128xf32, #tpu.memory_space<vmem>>, %arg8: memref<128x4xbf16, #tpu.memory_space<vmem>>, %arg9: memref<1x128xf32, #tpu.memory_space<vmem>>, %arg10: memref<128x128xbf16, #tpu.memory_space<vmem>>, %arg11: memref<1x128xf32, #tpu.memory_space<vmem>>, %arg12: memref<1x128xf32, #tpu.memory_space<vmem>>, %arg13: memref<1x128xf32, #tpu.memory_space<vmem>>, %arg14: memref<128x32xbf16, #tpu.memory_space<vmem>>, %arg15: memref<1x32xf32, #tpu.memory_space<vmem>>, %arg16: memref<8x32xf32, #tpu.memory_space<vmem>>, %arg17: memref<8x4xf32, #tpu.memory_space<vmem>>, %arg18: memref<8x128xf32, #tpu.memory_space<vmem>>, %arg19: memref<8x128xf32, #tpu.memory_space<vmem>>) attributes {dimension_semantics = [#tpu.dimension_semantics<parallel>, #tpu.dimension_semantics<arbitrary>], iteration_bounds = array<i64: 2, 2>, scalar_prefetch = 0 : i64, scratch_operands = 3 : i64, tpu.core_type = #tpu.core_type<tc>, window_params = [{transform_indices = @transform_0, window_bounds = array<i64: 1, 128>}, {transform_indices = @transform_1, window_bounds = array<i64: 128, 1>}, {transform_indices = @transform_2, window_bounds = array<i64: 128, 32>}, {pipeline_mode = #tpu.pipeline_mode<synchronous>, transform_indices = @transform_3, window_bounds = array<i64: 32, 128>}, {pipeline_mode = #tpu.pipeline_mode<synchronous>, transform_indices = @transform_4, window_bounds = array<i64: 1, 128>}, {pipeline_mode = #tpu.pipeline_mode<synchronous>, transform_indices = @transform_5, window_bounds = array<i64: 1, 128>}, {pipeline_mode = #tpu.pipeline_mode<synchronous>, transform_indices = @transform_6, window_bounds = array<i64: 128, 4>}, {pipeline_mode = #tpu.pipeline_mode<synchronous>, transform_indices = @transform_7, window_bounds = array<i64: 1, 128>}, {pipeline_mode = #tpu.pipeline_mode<synchronous>, transform_indices = @transform_8, window_bounds = array<i64: 128, 128>}, {pipeline_mode = #tpu.pipeline_mode<synchronous>, transform_indices = @transform_9, window_bounds = array<i64: 1, 128>}, {pipeline_mode = #tpu.pipeline_mode<synchronous>, transform_indices = @transform_10, window_bounds = array<i64: 1, 128>}, {pipeline_mode = #tpu.pipeline_mode<synchronous>, transform_indices = @transform_11, window_bounds = array<i64: 1, 128>}, {pipeline_mode = #tpu.pipeline_mode<synchronous>, transform_indices = @transform_12, window_bounds = array<i64: 128, 32>}, {pipeline_mode = #tpu.pipeline_mode<synchronous>, transform_indices = @transform_13, window_bounds = array<i64: 1, 32>}, {transform_indices = @transform_14, window_bounds = array<i64: 8, 32>}]} {
    %c8_i32 = arith.constant 8 : i32
    %0 = arith.muli %arg0, %c8_i32 : i32
    %c0_i32 = arith.constant 0 : i32
    %1 = arith.cmpi eq, %arg1, %c0_i32 : i32
    %2 = arith.extui %1 : i1 to i32
    %c0_i32_0 = arith.constant 0 : i32
    %3 = arith.cmpi ne, %2, %c0_i32_0 : i32
    scf.if %3 {
      %cst_42 = arith.constant -1.000000e+30 : f32
      %129 = vector.broadcast %cst_42 : f32 to vector<8x4xf32>
      %c0_43 = arith.constant 0 : index
      %c0_44 = arith.constant 0 : index
      %130 = vector.load %arg17[%c0_43, %c0_44] : memref<8x4xf32, #tpu.memory_space<vmem>>, vector<8x4xf32>
      tpu.vector_store %arg17[%c0_43, %c0_44], %129 {strides = array<i32>} : memref<8x4xf32, #tpu.memory_space<vmem>>, vector<8x4xf32>,
      %cst_45 = arith.constant 0.000000e+00 : f32
      %131 = vector.broadcast %cst_45 : f32 to vector<8x128xf32>
      %c0_46 = arith.constant 0 : index
      %c0_47 = arith.constant 0 : index
      %132 = vector.load %arg18[%c0_46, %c0_47] : memref<8x128xf32, #tpu.memory_space<vmem>>, vector<8x128xf32>
      tpu.vector_store %arg18[%c0_46, %c0_47], %131 {strides = array<i32>} : memref<8x128xf32, #tpu.memory_space<vmem>>, vector<8x128xf32>,
      %cst_48 = arith.constant 0.000000e+00 : f32
      %133 = vector.broadcast %cst_48 : f32 to vector<8x128xf32>
      %c0_49 = arith.constant 0 : index
      %c0_50 = arith.constant 0 : index
      %134 = vector.load %arg19[%c0_49, %c0_50] : memref<8x128xf32, #tpu.memory_space<vmem>>, vector<8x128xf32>
      tpu.vector_store %arg19[%c0_49, %c0_50], %133 {strides = array<i32>} : memref<8x128xf32, #tpu.memory_space<vmem>>, vector<8x128xf32>,
    } else {
    }
    %c0 = arith.constant 0 : index
    %c0_1 = arith.constant 0 : index
    %4 = vector.load %arg4[%c0, %c0_1] : memref<128x32xbf16, #tpu.memory_space<vmem>>, vector<128x32xbf16>
    %c0_2 = arith.constant 0 : index
    %c0_3 = arith.constant 0 : index
    %5 = vector.load %arg5[%c0_2, %c0_3] : memref<32x128xbf16, #tpu.memory_space<vmem>>, vector<32x128xbf16>
    %cst = arith.constant dense<0.000000e+00> : vector<128x128xf32>
    %6 = tpu.matmul %4, %5, %cst {dimension_numbers = #tpu.dot_dimension_numbers<[1], [0], [0], [1], [0, 0, 1, 1], [], []>} : vector<128x32xbf16>, vector<32x128xbf16>, vector<128x128xf32> -> vector<128x128xf32>
    %c0_4 = arith.constant 0 : index
    %c0_5 = arith.constant 0 : index
    %7 = vector.load %arg6[%c0_4, %c0_5] : memref<1x128xf32, #tpu.memory_space<vmem>>, vector<1x128xf32>
    %8 = vector.broadcast %7 : vector<1x128xf32> to vector<128x128xf32>
    %9 = arith.addf %6, %8 : vector<128x128xf32>
    %c0_6 = arith.constant 0 : index
    %c0_7 = arith.constant 0 : index
    %10 = vector.load %arg7[%c0_6, %c0_7] : memref<1x128xf32, #tpu.memory_space<vmem>>, vector<1x128xf32>
    %11 = vector.broadcast %10 : vector<1x128xf32> to vector<128x128xf32>
    %12 = arith.addf %6, %11 : vector<128x128xf32>
    %cst_8 = arith.constant 0.000000e+00 : f32
    %13 = vector.broadcast %cst_8 : f32 to vector<128x128xf32>
    %14 = arith.cmpf ogt, %12, %13 : vector<128x128xf32>
    %cst_9 = arith.constant 2.000000e-01 : f32
    %15 = vector.broadcast %cst_9 : f32 to vector<128x128xf32>
    %16 = arith.mulf %15, %12 : vector<128x128xf32>
    %17 = arith.select %14, %12, %16 : vector<128x128xi1>, vector<128x128xf32>
    %18 = arith.truncf %17 : vector<128x128xf32> to vector<128x128xbf16>
    %c0_10 = arith.constant 0 : index
    %c0_11 = arith.constant 0 : index
    %19 = vector.load %arg8[%c0_10, %c0_11] : memref<128x4xbf16, #tpu.memory_space<vmem>>, vector<128x4xbf16>
    %cst_12 = arith.constant dense<0.000000e+00> : vector<128x4xf32>
    %20 = tpu.matmul %18, %19, %cst_12 {dimension_numbers = #tpu.dot_dimension_numbers<[1], [0], [0], [1], [0, 0, 1, 1], [], []>} : vector<128x128xbf16>, vector<128x4xbf16>, vector<128x4xf32> -> vector<128x4xf32>
    %c0_13 = arith.constant 0 : index
    %c0_14 = arith.constant 0 : index
    %21 = vector.load %arg2[%c0_13, %c0_14] : memref<1x128xi32, #tpu.memory_space<vmem>>, vector<1x128xi32>
    %c0_15 = arith.constant 0 : index
    %c0_16 = arith.constant 0 : index
    %22 = vector.load %arg3[%c0_15, %c0_16] : memref<128x1xi32, #tpu.memory_space<vmem>>, vector<128x1xi32>
    %23 = tpu.iota {dimensions = array<i32: 0>} : vector<8x128xi32>
    %24 = vector.broadcast %0 : i32 to vector<8x128xi32>
    %25 = arith.addi %23, %24 : vector<8x128xi32>
    %26 = tpu.iota {dimensions = array<i32: 1>} : vector<128x8xi32>
    %27 = vector.broadcast %0 : i32 to vector<128x8xi32>
    %28 = arith.addi %26, %27 : vector<128x8xi32>
    %29 = vector.broadcast %21 : vector<1x128xi32> to vector<8x128xi32>
    %30 = arith.cmpi eq, %25, %29 : vector<8x128xi32>
    %31 = vector.broadcast %22 : vector<128x1xi32> to vector<128x8xi32>
    %32 = arith.cmpi eq, %28, %31 : vector<128x8xi32>
    %33 = arith.extui %30 : vector<8x128xi1> to vector<8x128xi32>
    %34 = arith.sitofp %33 : vector<8x128xi32> to vector<8x128xf32>
    %35 = arith.truncf %34 : vector<8x128xf32> to vector<8x128xbf16>
    %36 = arith.extui %32 : vector<128x8xi1> to vector<128x8xi32>
    %37 = arith.sitofp %36 : vector<128x8xi32> to vector<128x8xf32>
    %38 = vector.broadcast %0 : i32 to vector<128x1xi32>
    %39 = arith.cmpi sge, %22, %38 : vector<128x1xi32>
    %c8_i32_17 = arith.constant 8 : i32
    %40 = arith.addi %0, %c8_i32_17 : i32
    %41 = vector.broadcast %40 : i32 to vector<128x1xi32>
    %42 = arith.cmpi slt, %22, %41 : vector<128x1xi32>
    %43 = arith.andi %39, %42 : vector<128x1xi1>
    %44 = tpu.transpose %20, [1, 0] : vector<128x4xf32> -> vector<4x128xf32>
    %45 = vector.extract_strided_slice %44 {offsets = [0, 0], sizes = [1, 128], strides = [1, 1]} : vector<4x128xf32> to vector<1x128xf32>
    %cst_18 = arith.constant -1.000000e+30 : f32
    %46 = vector.shape_cast %45 : vector<1x128xf32> to vector<1x128xf32>
    %47 = vector.broadcast %46 : vector<1x128xf32> to vector<8x128xf32>
    %48 = vector.broadcast %cst_18 : f32 to vector<8x128xf32>
    %49 = arith.select %30, %47, %48 : vector<8x128xi1>, vector<8x128xf32>
    %cst_19 = arith.constant dense<0xFF800000> : vector<8xf32>
    %50 = vector.multi_reduction <maximumf>, %49, %cst_19 [1] : vector<8x128xf32> to vector<8xf32>
    %51 = vector.shape_cast %50 : vector<8xf32> to vector<8x1xf32>
    %52 = vector.extract_strided_slice %44 {offsets = [1, 0], sizes = [1, 128], strides = [1, 1]} : vector<4x128xf32> to vector<1x128xf32>
    %cst_20 = arith.constant -1.000000e+30 : f32
    %53 = vector.shape_cast %52 : vector<1x128xf32> to vector<1x128xf32>
    %54 = vector.broadcast %53 : vector<1x128xf32> to vector<8x128xf32>
    %55 = vector.broadcast %cst_20 : f32 to vector<8x128xf32>
    %56 = arith.select %30, %54, %55 : vector<8x128xi1>, vector<8x128xf32>
    %cst_21 = arith.constant dense<0xFF800000> : vector<8xf32>
    %57 = vector.multi_reduction <maximumf>, %56, %cst_21 [1] : vector<8x128xf32> to vector<8xf32>
    %58 = vector.shape_cast %57 : vector<8xf32> to vector<8x1xf32>
    %59 = vector.extract_strided_slice %44 {offsets = [2, 0], sizes = [1, 128], strides = [1, 1]} : vector<4x128xf32> to vector<1x128xf32>
    %cst_22 = arith.constant -1.000000e+30 : f32
    %60 = vector.shape_cast %59 : vector<1x128xf32> to vector<1x128xf32>
    %61 = vector.broadcast %60 : vector<1x128xf32> to vector<8x128xf32>
    %62 = vector.broadcast %cst_22 : f32 to vector<8x128xf32>
    %63 = arith.select %30, %61, %62 : vector<8x128xi1>, vector<8x128xf32>
    %cst_23 = arith.constant dense<0xFF800000> : vector<8xf32>
    %64 = vector.multi_reduction <maximumf>, %63, %cst_23 [1] : vector<8x128xf32> to vector<8xf32>
    %65 = vector.shape_cast %64 : vector<8xf32> to vector<8x1xf32>
    %66 = vector.extract_strided_slice %44 {offsets = [3, 0], sizes = [1, 128], strides = [1, 1]} : vector<4x128xf32> to vector<1x128xf32>
    %cst_24 = arith.constant -1.000000e+30 : f32
    %67 = vector.shape_cast %66 : vector<1x128xf32> to vector<1x128xf32>
    %68 = vector.broadcast %67 : vector<1x128xf32> to vector<8x128xf32>
    %69 = vector.broadcast %cst_24 : f32 to vector<8x128xf32>
    %70 = arith.select %30, %68, %69 : vector<8x128xi1>, vector<8x128xf32>
    %cst_25 = arith.constant dense<0xFF800000> : vector<8xf32>
    %71 = vector.multi_reduction <maximumf>, %70, %cst_25 [1] : vector<8x128xf32> to vector<8xf32>
    %72 = vector.shape_cast %71 : vector<8xf32> to vector<8x1xf32>
    %73 = tpu.concatenate %51, %58, %65, %72 in 1 : vector<8x1xf32>, vector<8x1xf32>, vector<8x1xf32>, vector<8x1xf32> -> vector<8x4xf32>
    %c0_26 = arith.constant 0 : index
    %c0_27 = arith.constant 0 : index
    %74 = vector.load %arg17[%c0_26, %c0_27] : memref<8x4xf32, #tpu.memory_space<vmem>>, vector<8x4xf32>
    %75 = arith.maximumf %74, %73 : vector<8x4xf32>
    %76 = arith.subf %74, %75 : vector<8x4xf32>
    %77 = math.exp %76 : vector<8x4xf32>
    %78 = vector.extract_strided_slice %77 {offsets = [0, 0], sizes = [8, 1], strides = [1, 1]} : vector<8x4xf32> to vector<8x1xf32>
    %79 = vector.shape_cast %78 : vector<8x1xf32> to vector<8x1xf32>
    %80 = vector.broadcast %79 : vector<8x1xf32> to vector<8x32xf32>
    %81 = vector.extract_strided_slice %77 {offsets = [0, 1], sizes = [8, 1], strides = [1, 1]} : vector<8x4xf32> to vector<8x1xf32>
    %82 = vector.shape_cast %81 : vector<8x1xf32> to vector<8x1xf32>
    %83 = vector.broadcast %82 : vector<8x1xf32> to vector<8x32xf32>
    %84 = vector.extract_strided_slice %77 {offsets = [0, 2], sizes = [8, 1], strides = [1, 1]} : vector<8x4xf32> to vector<8x1xf32>
    %85 = vector.shape_cast %84 : vector<8x1xf32> to vector<8x1xf32>
    %86 = vector.broadcast %85 : vector<8x1xf32> to vector<8x32xf32>
    %87 = vector.extract_strided_slice %77 {offsets = [0, 3], sizes = [8, 1], strides = [1, 1]} : vector<8x4xf32> to vector<8x1xf32>
    %88 = vector.shape_cast %87 : vector<8x1xf32> to vector<8x1xf32>
    %89 = vector.broadcast %88 : vector<8x1xf32> to vector<8x32xf32>
    %90 = tpu.concatenate %80, %83, %86, %89 in 1 : vector<8x32xf32>, vector<8x32xf32>, vector<8x32xf32>, vector<8x32xf32> -> vector<8x128xf32>
    %cst_28 = arith.constant dense<0.000000e+00> : vector<128x4xf32>
    %91 = tpu.matmul %37, %75, %cst_28 {dimension_numbers = #tpu.dot_dimension_numbers<[1], [0], [0], [1], [0, 0, 1, 1], [], []>} : vector<128x8xf32>, vector<8x4xf32>, vector<128x4xf32> -> vector<128x4xf32>
    %92 = arith.subf %20, %91 : vector<128x4xf32>
    %cst_29 = arith.constant -1.000000e+30 : f32
    %93 = vector.shape_cast %43 : vector<128x1xi1> to vector<128x1xi1>
    %94 = vector.broadcast %93 : vector<128x1xi1> to vector<128x4xi1>
    %95 = vector.broadcast %cst_29 : f32 to vector<128x4xf32>
    %96 = arith.select %94, %92, %95 : vector<128x4xi1>, vector<128x4xf32>
    %97 = math.exp %96 : vector<128x4xf32>
    %98 = vector.extract_strided_slice %97 {offsets = [0, 0], sizes = [128, 1], strides = [1, 1]} : vector<128x4xf32> to vector<128x1xf32>
    %99 = vector.shape_cast %98 : vector<128x1xf32> to vector<128x1xf32>
    %100 = vector.broadcast %99 : vector<128x1xf32> to vector<128x32xf32>
    %101 = vector.extract_strided_slice %97 {offsets = [0, 1], sizes = [128, 1], strides = [1, 1]} : vector<128x4xf32> to vector<128x1xf32>
    %102 = vector.shape_cast %101 : vector<128x1xf32> to vector<128x1xf32>
    %103 = vector.broadcast %102 : vector<128x1xf32> to vector<128x32xf32>
    %104 = vector.extract_strided_slice %97 {offsets = [0, 2], sizes = [128, 1], strides = [1, 1]} : vector<128x4xf32> to vector<128x1xf32>
    %105 = vector.shape_cast %104 : vector<128x1xf32> to vector<128x1xf32>
    %106 = vector.broadcast %105 : vector<128x1xf32> to vector<128x32xf32>
    %107 = vector.extract_strided_slice %97 {offsets = [0, 3], sizes = [128, 1], strides = [1, 1]} : vector<128x4xf32> to vector<128x1xf32>
    %108 = vector.shape_cast %107 : vector<128x1xf32> to vector<128x1xf32>
    %109 = vector.broadcast %108 : vector<128x1xf32> to vector<128x32xf32>
    %110 = tpu.concatenate %100, %103, %106, %109 in 1 : vector<128x32xf32>, vector<128x32xf32>, vector<128x32xf32>, vector<128x32xf32> -> vector<128x128xf32>
    %111 = arith.mulf %9, %110 : vector<128x128xf32>
    %112 = tpu.concatenate %111, %110 in 1 : vector<128x128xf32>, vector<128x128xf32> -> vector<128x256xf32>
    %113 = arith.truncf %112 : vector<128x256xf32> to vector<128x256xbf16>
    %cst_30 = arith.constant dense<0.000000e+00> : vector<8x256xf32>
    %114 = tpu.matmul %35, %113, %cst_30 {dimension_numbers = #tpu.dot_dimension_numbers<[1], [0], [0], [1], [0, 0, 1, 1], [], []>} : vector<8x128xbf16>, vector<128x256xbf16>, vector<8x256xf32> -> vector<8x256xf32>
    %c0_31 = arith.constant 0 : index
    %c0_32 = arith.constant 0 : index
    %115 = vector.load %arg19[%c0_31, %c0_32] : memref<8x128xf32, #tpu.memory_space<vmem>>, vector<8x128xf32>
    %116 = arith.mulf %115, %90 : vector<8x128xf32>
    %117 = vector.extract_strided_slice %114 {offsets = [0, 0], sizes = [8, 128], strides = [1, 1]} : vector<8x256xf32> to vector<8x128xf32>
    %118 = arith.addf %116, %117 : vector<8x128xf32>
    %c0_33 = arith.constant 0 : index
    %c0_34 = arith.constant 0 : index
    %119 = vector.load %arg19[%c0_33, %c0_34] : memref<8x128xf32, #tpu.memory_space<vmem>>, vector<8x128xf32>
    tpu.vector_store %arg19[%c0_33, %c0_34], %118 {strides = array<i32>} : memref<8x128xf32, #tpu.memory_space<vmem>>, vector<8x128xf32>,
    %c0_35 = arith.constant 0 : index
    %c0_36 = arith.constant 0 : index
    %120 = vector.load %arg18[%c0_35, %c0_36] : memref<8x128xf32, #tpu.memory_space<vmem>>, vector<8x128xf32>
    %121 = arith.mulf %120, %90 : vector<8x128xf32>
    %122 = vector.extract_strided_slice %114 {offsets = [0, 128], sizes = [8, 128], strides = [1, 1]} : vector<8x256xf32> to vector<8x128xf32>
    %123 = arith.addf %121, %122 : vector<8x128xf32>
    %c0_37 = arith.constant 0 : index
    %c0_38 = arith.constant 0 : index
    %124 = vector.load %arg18[%c0_37, %c0_38] : memref<8x128xf32, #tpu.memory_space<vmem>>, vector<8x128xf32>
    tpu.vector_store %arg18[%c0_37, %c0_38], %123 {strides = array<i32>} : memref<8x128xf32, #tpu.memory_space<vmem>>, vector<8x128xf32>,
    %c0_39 = arith.constant 0 : index
    %c0_40 = arith.constant 0 : index
    %125 = vector.load %arg17[%c0_39, %c0_40] : memref<8x4xf32, #tpu.memory_space<vmem>>, vector<8x4xf32>
    tpu.vector_store %arg17[%c0_39, %c0_40], %75 {strides = array<i32>} : memref<8x4xf32, #tpu.memory_space<vmem>>, vector<8x4xf32>,
    %c1_i32 = arith.constant 1 : i32
    %126 = arith.cmpi eq, %arg1, %c1_i32 : i32
    %127 = arith.extui %126 : i1 to i32
    %c0_i32_41 = arith.constant 0 : i32
    %128 = arith.cmpi ne, %127, %c0_i32_41 : i32
    scf.if %128 {
      %c0_42 = arith.constant 0 : index
      %c0_43 = arith.constant 0 : index
      %129 = vector.load %arg18[%c0_42, %c0_43] : memref<8x128xf32, #tpu.memory_space<vmem>>, vector<8x128xf32>
      %cst_44 = arith.constant 0.000000e+00 : f32
      %130 = vector.broadcast %cst_44 : f32 to vector<8x128xf32>
      %131 = arith.cmpf ogt, %129, %130 : vector<8x128xf32>
      %cst_45 = arith.constant 1.000000e+00 : f32
      %132 = vector.broadcast %cst_45 : f32 to vector<8x128xf32>
      %133 = arith.select %131, %129, %132 : vector<8x128xi1>, vector<8x128xf32>
      %134 = tpu.reciprocal %133 {approx = true} : vector<8x128xf32> -> vector<8x128xf32>
      %c0_46 = arith.constant 0 : index
      %c0_47 = arith.constant 0 : index
      %135 = vector.load %arg19[%c0_46, %c0_47] : memref<8x128xf32, #tpu.memory_space<vmem>>, vector<8x128xf32>
      %136 = arith.mulf %135, %134 : vector<8x128xf32>
      %cst_48 = arith.constant 0.000000e+00 : f32
      %137 = vector.broadcast %cst_48 : f32 to vector<8x128xf32>
      %138 = arith.select %131, %136, %137 : vector<8x128xi1>, vector<8x128xf32>
      %c0_49 = arith.constant 0 : index
      %c0_50 = arith.constant 0 : index
      %139 = vector.load %arg9[%c0_49, %c0_50] : memref<1x128xf32, #tpu.memory_space<vmem>>, vector<1x128xf32>
      %140 = vector.broadcast %139 : vector<1x128xf32> to vector<8x128xf32>
      %141 = arith.addf %138, %140 : vector<8x128xf32>
      %142 = arith.truncf %141 : vector<8x128xf32> to vector<8x128xbf16>
      %c0_51 = arith.constant 0 : index
      %c0_52 = arith.constant 0 : index
      %143 = vector.load %arg10[%c0_51, %c0_52] : memref<128x128xbf16, #tpu.memory_space<vmem>>, vector<128x128xbf16>
      %cst_53 = arith.constant dense<0.000000e+00> : vector<8x128xf32>
      %144 = tpu.matmul %142, %143, %cst_53 {dimension_numbers = #tpu.dot_dimension_numbers<[1], [0], [0], [1], [0, 0, 1, 1], [], []>} : vector<8x128xbf16>, vector<128x128xbf16>, vector<8x128xf32> -> vector<8x128xf32>
      %c0_54 = arith.constant 0 : index
      %c0_55 = arith.constant 0 : index
      %145 = vector.load %arg11[%c0_54, %c0_55] : memref<1x128xf32, #tpu.memory_space<vmem>>, vector<1x128xf32>
      %146 = vector.broadcast %145 : vector<1x128xf32> to vector<8x128xf32>
      %147 = arith.addf %144, %146 : vector<8x128xf32>
      %cst_56 = arith.constant dense<0.000000e+00> : vector<8xf32>
      %148 = vector.multi_reduction <add>, %147, %cst_56 [1] : vector<8x128xf32> to vector<8xf32>
      %149 = vector.shape_cast %148 : vector<8xf32> to vector<8x1xf32>
      %cst_57 = arith.constant 1.280000e+02 : f32
      %150 = vector.broadcast %cst_57 : f32 to vector<8x1xf32>
      %151 = arith.divf %149, %150 : vector<8x1xf32>
      %152 = vector.broadcast %151 : vector<8x1xf32> to vector<8x128xf32>
      %153 = arith.subf %147, %152 : vector<8x128xf32>
      %154 = vector.broadcast %151 : vector<8x1xf32> to vector<8x128xf32>
      %155 = arith.subf %147, %154 : vector<8x128xf32>
      %156 = arith.mulf %153, %155 : vector<8x128xf32>
      %cst_58 = arith.constant dense<0.000000e+00> : vector<8xf32>
      %157 = vector.multi_reduction <add>, %156, %cst_58 [1] : vector<8x128xf32> to vector<8xf32>
      %158 = vector.shape_cast %157 : vector<8xf32> to vector<8x1xf32>
      %cst_59 = arith.constant 1.280000e+02 : f32
      %159 = vector.broadcast %cst_59 : f32 to vector<8x1xf32>
      %160 = arith.divf %158, %159 : vector<8x1xf32>
      %161 = vector.broadcast %151 : vector<8x1xf32> to vector<8x128xf32>
      %162 = arith.subf %147, %161 : vector<8x128xf32>
      %cst_60 = arith.constant 9.99999974E-6 : f32
      %163 = vector.broadcast %cst_60 : f32 to vector<8x1xf32>
      %164 = arith.addf %160, %163 : vector<8x1xf32>
      %165 = math.rsqrt %164 : vector<8x1xf32>
      %166 = vector.broadcast %165 : vector<8x1xf32> to vector<8x128xf32>
      %167 = arith.mulf %162, %166 : vector<8x128xf32>
      %c0_61 = arith.constant 0 : index
      %c0_62 = arith.constant 0 : index
      %168 = vector.load %arg12[%c0_61, %c0_62] : memref<1x128xf32, #tpu.memory_space<vmem>>, vector<1x128xf32>
      %169 = vector.broadcast %168 : vector<1x128xf32> to vector<8x128xf32>
      %170 = arith.mulf %167, %169 : vector<8x128xf32>
      %c0_63 = arith.constant 0 : index
      %c0_64 = arith.constant 0 : index
      %171 = vector.load %arg13[%c0_63, %c0_64] : memref<1x128xf32, #tpu.memory_space<vmem>>, vector<1x128xf32>
      %172 = vector.broadcast %171 : vector<1x128xf32> to vector<8x128xf32>
      %173 = arith.addf %170, %172 : vector<8x128xf32>
      %174 = arith.mulf %173, %173 : vector<8x128xf32>
      %175 = arith.mulf %173, %174 : vector<8x128xf32>
      %cst_65 = arith.constant 4.471500e-02 : f32
      %176 = vector.broadcast %cst_65 : f32 to vector<8x128xf32>
      %177 = arith.mulf %176, %175 : vector<8x128xf32>
      %178 = arith.addf %173, %177 : vector<8x128xf32>
      %cst_66 = arith.constant 0.797884583 : f32
      %179 = vector.broadcast %cst_66 : f32 to vector<8x128xf32>
      %180 = arith.mulf %179, %178 : vector<8x128xf32>
      %181 = math.tanh %180 : vector<8x128xf32>
      %cst_67 = arith.constant 1.000000e+00 : f32
      %182 = vector.broadcast %cst_67 : f32 to vector<8x128xf32>
      %183 = arith.addf %182, %181 : vector<8x128xf32>
      %cst_68 = arith.constant 5.000000e-01 : f32
      %184 = vector.broadcast %cst_68 : f32 to vector<8x128xf32>
      %185 = arith.mulf %184, %183 : vector<8x128xf32>
      %186 = arith.mulf %173, %185 : vector<8x128xf32>
      %187 = arith.truncf %186 : vector<8x128xf32> to vector<8x128xbf16>
      %c0_69 = arith.constant 0 : index
      %c0_70 = arith.constant 0 : index
      %188 = vector.load %arg14[%c0_69, %c0_70] : memref<128x32xbf16, #tpu.memory_space<vmem>>, vector<128x32xbf16>
      %cst_71 = arith.constant dense<0.000000e+00> : vector<8x32xf32>
      %189 = tpu.matmul %187, %188, %cst_71 {dimension_numbers = #tpu.dot_dimension_numbers<[1], [0], [0], [1], [0, 0, 1, 1], [], []>} : vector<8x128xbf16>, vector<128x32xbf16>, vector<8x32xf32> -> vector<8x32xf32>
      %c0_72 = arith.constant 0 : index
      %c0_73 = arith.constant 0 : index
      %190 = vector.load %arg15[%c0_72, %c0_73] : memref<1x32xf32, #tpu.memory_space<vmem>>, vector<1x32xf32>
      %191 = vector.broadcast %190 : vector<1x32xf32> to vector<8x32xf32>
      %192 = arith.addf %189, %191 : vector<8x32xf32>
      %c0_74 = arith.constant 0 : index
      %c0_75 = arith.constant 0 : index
      %193 = vector.load %arg16[%c0_74, %c0_75] : memref<8x32xf32, #tpu.memory_space<vmem>>, vector<8x32xf32>
      tpu.vector_store %arg16[%c0_74, %c0_75], %192 {strides = array<i32>} : memref<8x32xf32, #tpu.memory_space<vmem>>, vector<8x32xf32>,
    } else {
    }
    return
  }
  func.func @transform_0(%arg0: i32, %arg1: i32) -> (i32, i32) {
    %c0_i32 = arith.constant 0 : i32
    %c0_i32_0 = arith.constant 0 : i32
    return %c0_i32, %arg1 : i32, i32
  }
  func.func @transform_1(%arg0: i32, %arg1: i32) -> (i32, i32) {
    %c0_i32 = arith.constant 0 : i32
    %c0_i32_0 = arith.constant 0 : i32
    return %arg1, %c0_i32 : i32, i32
  }
  func.func @transform_2(%arg0: i32, %arg1: i32) -> (i32, i32) {
    %c0_i32 = arith.constant 0 : i32
    %c0_i32_0 = arith.constant 0 : i32
    return %arg1, %c0_i32 : i32, i32
  }
  func.func @transform_3(%arg0: i32, %arg1: i32) -> (i32, i32) {
    %c0_i32 = arith.constant 0 : i32
    %c0_i32_0 = arith.constant 0 : i32
    %c0_i32_1 = arith.constant 0 : i32
    return %c0_i32, %c0_i32_0 : i32, i32
  }
  func.func @transform_4(%arg0: i32, %arg1: i32) -> (i32, i32) {
    %c0_i32 = arith.constant 0 : i32
    %c0_i32_0 = arith.constant 0 : i32
    %c0_i32_1 = arith.constant 0 : i32
    return %c0_i32, %c0_i32_0 : i32, i32
  }
  func.func @transform_5(%arg0: i32, %arg1: i32) -> (i32, i32) {
    %c0_i32 = arith.constant 0 : i32
    %c0_i32_0 = arith.constant 0 : i32
    %c0_i32_1 = arith.constant 0 : i32
    return %c0_i32, %c0_i32_0 : i32, i32
  }
  func.func @transform_6(%arg0: i32, %arg1: i32) -> (i32, i32) {
    %c0_i32 = arith.constant 0 : i32
    %c0_i32_0 = arith.constant 0 : i32
    %c0_i32_1 = arith.constant 0 : i32
    return %c0_i32, %c0_i32_0 : i32, i32
  }
  func.func @transform_7(%arg0: i32, %arg1: i32) -> (i32, i32) {
    %c0_i32 = arith.constant 0 : i32
    %c0_i32_0 = arith.constant 0 : i32
    %c0_i32_1 = arith.constant 0 : i32
    return %c0_i32, %c0_i32_0 : i32, i32
  }
  func.func @transform_8(%arg0: i32, %arg1: i32) -> (i32, i32) {
    %c0_i32 = arith.constant 0 : i32
    %c0_i32_0 = arith.constant 0 : i32
    %c0_i32_1 = arith.constant 0 : i32
    return %c0_i32, %c0_i32_0 : i32, i32
  }
  func.func @transform_9(%arg0: i32, %arg1: i32) -> (i32, i32) {
    %c0_i32 = arith.constant 0 : i32
    %c0_i32_0 = arith.constant 0 : i32
    %c0_i32_1 = arith.constant 0 : i32
    return %c0_i32, %c0_i32_0 : i32, i32
  }
  func.func @transform_10(%arg0: i32, %arg1: i32) -> (i32, i32) {
    %c0_i32 = arith.constant 0 : i32
    %c0_i32_0 = arith.constant 0 : i32
    %c0_i32_1 = arith.constant 0 : i32
    return %c0_i32, %c0_i32_0 : i32, i32
  }
  func.func @transform_11(%arg0: i32, %arg1: i32) -> (i32, i32) {
    %c0_i32 = arith.constant 0 : i32
    %c0_i32_0 = arith.constant 0 : i32
    %c0_i32_1 = arith.constant 0 : i32
    return %c0_i32, %c0_i32_0 : i32, i32
  }
  func.func @transform_12(%arg0: i32, %arg1: i32) -> (i32, i32) {
    %c0_i32 = arith.constant 0 : i32
    %c0_i32_0 = arith.constant 0 : i32
    %c0_i32_1 = arith.constant 0 : i32
    return %c0_i32, %c0_i32_0 : i32, i32
  }
  func.func @transform_13(%arg0: i32, %arg1: i32) -> (i32, i32) {
    %c0_i32 = arith.constant 0 : i32
    %c0_i32_0 = arith.constant 0 : i32
    %c0_i32_1 = arith.constant 0 : i32
    return %c0_i32, %c0_i32_0 : i32, i32
  }
  func.func @transform_14(%arg0: i32, %arg1: i32) -> (i32, i32) {
    %c0_i32 = arith.constant 0 : i32
    %c0_i32_0 = arith.constant 0 : i32
    return %arg0, %c0_i32 : i32, i32
  }
}

</mosaic_0001>

<llo_original>
// kernel: tpu_custom_call.1
$region0: #{tpu_custom_call.1}
  #allocation0 [shape = 'u32[]', space=smem, size = 0x4, offset = 0x4, fixed_abs, tag = 'smem constant byte address 0x4 - core index']
  #allocation1 [shape = 'u32[72,128]{1,0:T(1,128)}', space=vmem, size = 0x9000, scoped, tag = 'internal scratch']
  #allocation2 [shape = 'f32[8,4]{1,0:T(8,128)}', space=vmem, size = 0x1000, scoped, tag = 'scratch operand']
  #allocation3 [shape = 'f32[8,128]{1,0:T(8,128)}', space=vmem, size = 0x1000, scoped, tag = 'scratch operand']
  #allocation4 [shape = 'f32[8,128]{1,0:T(8,128)}', space=vmem, size = 0x1000, scoped, tag = 'scratch operand']
  %s0 = inlined_call_operand.vmem [shape: s32[1,256], index: 0, kind: input, shape index: {}]
  %s1 = inlined_call_operand.vmem [shape: s32[256,1], index: 1, kind: input, shape index: {}]
  %s2 = inlined_call_operand.vmem [shape: bf16[256,32], index: 2, kind: input, shape index: {}]
  %s3 = inlined_call_operand.vmem [shape: bf16[32,128], index: 3, kind: input, shape index: {}]
  %s4 = inlined_call_operand.vmem [shape: f32[1,128], index: 4, kind: input, shape index: {}]
  %s5 = inlined_call_operand.vmem [shape: f32[1,128], index: 5, kind: input, shape index: {}]
  %s6 = inlined_call_operand.vmem [shape: bf16[128,4], index: 6, kind: input, shape index: {}]
  %s7 = inlined_call_operand.vmem [shape: f32[1,128], index: 7, kind: input, shape index: {}]
  %s8 = inlined_call_operand.vmem [shape: bf16[128,128], index: 8, kind: input, shape index: {}]
  %s9 = inlined_call_operand.vmem [shape: f32[1,128], index: 9, kind: input, shape index: {}]
  %s10 = inlined_call_operand.vmem [shape: f32[1,128], index: 10, kind: input, shape index: {}]
  %s11 = inlined_call_operand.vmem [shape: f32[1,128], index: 11, kind: input, shape index: {}]
  %s12 = inlined_call_operand.vmem [shape: bf16[128,32], index: 12, kind: input, shape index: {}]
  %s13 = inlined_call_operand.vmem [shape: f32[1,32], index: 13, kind: input, shape index: {}]
  %s14 = inlined_call_operand.hbm [shape: f32[16,32], index: 14, kind: output, shape index: {}]
  %s15 = sld [smem:[#allocation0]]
  $region97: #{tpu_custom_call.1} parent=0
    _
  %s17 = ssub.s32 1, %s15
  %s18 = scalar_select 0, %s17, %s15
  $region1: #{tpu_custom_call.1} parent=0
    #allocation5 [shape = 'u8[8192]{0}', space=vmem, size = 0x2000, scoped, tag = 'output window, operand 0']
    #allocation6 [shape = 's32[2]{0}', space=sflag, size = 0x8, scoped, tag = 'scoped memory for tpu_custom_call.1']
    %19 = vsyncpa [#allocation6], 0
    %s20 = scalar_lea.sflag [#allocation6], 1
    %21 = vsyncpa %s20, 0
    loop: start=0, step=1, limit=6
    $region2: #{tpu_custom_call.1} parent=1 // loop_pre_header
      _
    $region3: #{tpu_custom_call.1} parent=1 // loop_header
      %s23 = sphi 0, %s27
      %p24 = scmp.ge.s32.totalorder %s23, 6
      %s30 = sphi 0, %s42
      %s31 = sphi 0, %s38
      %s32 = sphi 0, %s30
      %s33 = sphi 0, %s31
      %s34 = sphi 0, %s32
      %s35 = sphi 0, %s33
      %s45 = sphi 0, %s47
      %s48 = sphi 0, %s45
      %s49 = sphi 0, %s48
      %s65 = sphi 0, %s49
      %s71 = sphi 0, %s73
      %s74 = sphi 0, %s71
      %s75 = sphi 0, %s74
      %s91 = sphi 0, %s75
      %s97 = sphi 0, %s99
      %s100 = sphi 0, %s97
      %s101 = sphi 0, %s100
      %s117 = sphi 0, %s101
      %s121 = sphi 0, %s121
      %s123 = sphi 0, %s121
      %s124 = sphi 0, %s123
      %s138 = sphi 0, %s124
      %s142 = sphi 0, %s142
      %s144 = sphi 0, %s142
      %s145 = sphi 0, %s144
      %s159 = sphi 0, %s145
      %s163 = sphi 0, %s163
      %s165 = sphi 0, %s163
      %s166 = sphi 0, %s165
      %s180 = sphi 0, %s166
      %s184 = sphi 0, %s184
      %s186 = sphi 0, %s184
      %s187 = sphi 0, %s186
      %s201 = sphi 0, %s187
      %s205 = sphi 0, %s205
      %s207 = sphi 0, %s205
      %s208 = sphi 0, %s207
      %s222 = sphi 0, %s208
      %s226 = sphi 0, %s226
      %s228 = sphi 0, %s226
      %s229 = sphi 0, %s228
      %s243 = sphi 0, %s229
      %s247 = sphi 0, %s247
      %s249 = sphi 0, %s247
      %s250 = sphi 0, %s249
      %s264 = sphi 0, %s250
      %s268 = sphi 0, %s268
      %s270 = sphi 0, %s268
      %s271 = sphi 0, %s270
      %s285 = sphi 0, %s271
      %s289 = sphi 0, %s289
      %s291 = sphi 0, %s289
      %s292 = sphi 0, %s291
      %s306 = sphi 0, %s292
      %s310 = sphi 0, %s310
      %s312 = sphi 0, %s310
      %s313 = sphi 0, %s312
      %s327 = sphi 0, %s313
      %s331 = sphi 0, %s331
      %s333 = sphi 0, %s331
      %s334 = sphi 0, %s333
      %s348 = sphi 0, %s334
      %s354 = sphi 0, %s356
      %s357 = sphi 0, %s354
      %s358 = sphi 0, %s357
      %s374 = sphi 0, %s358
    $region4: #{tpu_custom_call.1} parent=1 // loop_header_branch
      %26 = sbr.rel (%p24) target = $region8
    $region5: #{tpu_custom_call.1} parent=1 // loop_body
      %s28 = ssub.s32 %s23, 1
      %s29 = ssub.s32 %s23, 2
      %s36 = sadd.s32 1, %s31
      %p37 = scmp.ge.s32.totalorder %s36, 2
      %s38 = scalar_select %p37, 0, %s36
      %s39 = sadd.s32 1, %s30
      %s40 = scalar_select %p37, %s39, %s30
      %p41 = scmp.ge.s32.totalorder %s40, 2
      %s42 = scalar_select %p41, 0, %s40
      %s43 = ssub.s32 %s31, %s38
      %p44 = scmp.eq.s32.totalorder %s43, 0
      %s46 = sadd.s32 %s45, 1
      %s47 = scalar_select %p44, %s45, %s46
      %p50 = pneg %p44
      %p51 = scmp.eq.s32.totalorder %s23, 3
      %p52 = por %p50, %p51
      %p53 = scmp.ne.s32.totalorder %s45, %s48
      %p54 = scmp.eq.s32.totalorder %s23, 0
      %p55 = por %p53, %p54
      %p56 = scmp.ne.s32.totalorder %s45, %s48
      %p57 = scmp.eq.s32.totalorder %s28, 3
      %p58 = por %p56, %p57
      %p59 = scmp.ne.s32.totalorder %s48, %s49
      %p60 = scmp.eq.s32.totalorder %s28, 0
      %p61 = por %p59, %p60
      %p62 = scmp.ne.s32.totalorder %s48, %s49
      %p63 = scmp.eq.s32.totalorder %s29, 3
      %p64 = por %p62, %p63
      %p66 = scmp.ne.s32.totalorder %s49, %s65
      %p67 = scmp.eq.s32.totalorder %s29, 0
      %p68 = por %p66, %p67
      %s69 = ssub.s32 %s31, %s38
      %p70 = scmp.eq.s32.totalorder %s69, 0
      %s72 = sadd.s32 %s71, 1
      %s73 = scalar_select %p70, %s71, %s72
      %p76 = pneg %p70
      %p77 = scmp.eq.s32.totalorder %s23, 3
      %p78 = por %p76, %p77
      %p79 = scmp.ne.s32.totalorder %s71, %s74
      %p80 = scmp.eq.s32.totalorder %s23, 0
      %p81 = por %p79, %p80
      %p82 = scmp.ne.s32.totalorder %s71, %s74
      %p83 = scmp.eq.s32.totalorder %s28, 3
      %p84 = por %p82, %p83
      %p85 = scmp.ne.s32.totalorder %s74, %s75
      %p86 = scmp.eq.s32.totalorder %s28, 0
      %p87 = por %p85, %p86
      %p88 = scmp.ne.s32.totalorder %s74, %s75
      %p89 = scmp.eq.s32.totalorder %s29, 3
      %p90 = por %p88, %p89
      %p92 = scmp.ne.s32.totalorder %s75, %s91
      %p93 = scmp.eq.s32.totalorder %s29, 0
      %p94 = por %p92, %p93
      %s95 = ssub.s32 %s31, %s38
      %p96 = scmp.eq.s32.totalorder %s95, 0
      %s98 = sadd.s32 %s97, 1
      %s99 = scalar_select %p96, %s97, %s98
      %p102 = pneg %p96
      %p103 = scmp.eq.s32.totalorder %s23, 3
      %p104 = por %p102, %p103
      %p105 = scmp.ne.s32.totalorder %s97, %s100
      %p106 = scmp.eq.s32.totalorder %s23, 0
      %p107 = por %p105, %p106
      %p108 = scmp.ne.s32.totalorder %s97, %s100
      %p109 = scmp.eq.s32.totalorder %s28, 3
      %p110 = por %p108, %p109
      %p111 = scmp.ne.s32.totalorder %s100, %s101
      %p112 = scmp.eq.s32.totalorder %s28, 0
      %p113 = por %p111, %p112
      %p114 = scmp.ne.s32.totalorder %s100, %s101
      %p115 = scmp.eq.s32.totalorder %s29, 3
      %p116 = por %p114, %p115
      %p118 = scmp.ne.s32.totalorder %s101, %s117
      %p119 = scmp.eq.s32.totalorder %s29, 0
      %p120 = por %p118, %p119
      %s122 = sadd.s32 %s121, 1
      %p125 = scmp.eq.s32.totalorder %s23, 3
      %p126 = scmp.ne.s32.totalorder %s121, %s123
      %p127 = scmp.eq.s32.totalorder %s23, 0
      %p128 = por %p126, %p127
      %p129 = scmp.ne.s32.totalorder %s121, %s123
      %p130 = scmp.eq.s32.totalorder %s28, 3
      %p131 = por %p129, %p130
      %p132 = scmp.ne.s32.totalorder %s123, %s124
      %p133 = scmp.eq.s32.totalorder %s28, 0
      %p134 = por %p132, %p133
      %p135 = scmp.ne.s32.totalorder %s123, %s124
      %p136 = scmp.eq.s32.totalorder %s29, 3
      %p137 = por %p135, %p136
      %p139 = scmp.ne.s32.totalorder %s124, %s138
      %p140 = scmp.eq.s32.totalorder %s29, 0
      %p141 = por %p139, %p140
      %s143 = sadd.s32 %s142, 1
      %p146 = scmp.eq.s32.totalorder %s23, 3
      %p147 = scmp.ne.s32.totalorder %s142, %s144
      %p148 = scmp.eq.s32.totalorder %s23, 0
      %p149 = por %p147, %p148
      %p150 = scmp.ne.s32.totalorder %s142, %s144
      %p151 = scmp.eq.s32.totalorder %s28, 3
      %p152 = por %p150, %p151
      %p153 = scmp.ne.s32.totalorder %s144, %s145
      %p154 = scmp.eq.s32.totalorder %s28, 0
      %p155 = por %p153, %p154
      %p156 = scmp.ne.s32.totalorder %s144, %s145
      %p157 = scmp.eq.s32.totalorder %s29, 3
      %p158 = por %p156, %p157
      %p160 = scmp.ne.s32.totalorder %s145, %s159
      %p161 = scmp.eq.s32.totalorder %s29, 0
      %p162 = por %p160, %p161
      %s164 = sadd.s32 %s163, 1
      %p167 = scmp.eq.s32.totalorder %s23, 3
      %p168 = scmp.ne.s32.totalorder %s163, %s165
      %p169 = scmp.eq.s32.totalorder %s23, 0
      %p170 = por %p168, %p169
      %p171 = scmp.ne.s32.totalorder %s163, %s165
      %p172 = scmp.eq.s32.totalorder %s28, 3
      %p173 = por %p171, %p172
      %p174 = scmp.ne.s32.totalorder %s165, %s166
      %p175 = scmp.eq.s32.totalorder %s28, 0
      %p176 = por %p174, %p175
      %p177 = scmp.ne.s32.totalorder %s165, %s166
      %p178 = scmp.eq.s32.totalorder %s29, 3
      %p179 = por %p177, %p178
      %p181 = scmp.ne.s32.totalorder %s166, %s180
      %p182 = scmp.eq.s32.totalorder %s29, 0
      %p183 = por %p181, %p182
      %s185 = sadd.s32 %s184, 1
      %p188 = scmp.eq.s32.totalorder %s23, 3
      %p189 = scmp.ne.s32.totalorder %s184, %s186
      %p190 = scmp.eq.s32.totalorder %s23, 0
      %p191 = por %p189, %p190
      %p192 = scmp.ne.s32.totalorder %s184, %s186
      %p193 = scmp.eq.s32.totalorder %s28, 3
      %p194 = por %p192, %p193
      %p195 = scmp.ne.s32.totalorder %s186, %s187
      %p196 = scmp.eq.s32.totalorder %s28, 0
      %p197 = por %p195, %p196
      %p198 = scmp.ne.s32.totalorder %s186, %s187
      %p199 = scmp.eq.s32.totalorder %s29, 3
      %p200 = por %p198, %p199
      %p202 = scmp.ne.s32.totalorder %s187, %s201
      %p203 = scmp.eq.s32.totalorder %s29, 0
      %p204 = por %p202, %p203
      %s206 = sadd.s32 %s205, 1
      %p209 = scmp.eq.s32.totalorder %s23, 3
      %p210 = scmp.ne.s32.totalorder %s205, %s207
      %p211 = scmp.eq.s32.totalorder %s23, 0
      %p212 = por %p210, %p211
      %p213 = scmp.ne.s32.totalorder %s205, %s207
      %p214 = scmp.eq.s32.totalorder %s28, 3
      %p215 = por %p213, %p214
      %p216 = scmp.ne.s32.totalorder %s207, %s208
      %p217 = scmp.eq.s32.totalorder %s28, 0
      %p218 = por %p216, %p217
      %p219 = scmp.ne.s32.totalorder %s207, %s208
      %p220 = scmp.eq.s32.totalorder %s29, 3
      %p221 = por %p219, %p220
      %p223 = scmp.ne.s32.totalorder %s208, %s222
      %p224 = scmp.eq.s32.totalorder %s29, 0
      %p225 = por %p223, %p224
      %s227 = sadd.s32 %s226, 1
      %p230 = scmp.eq.s32.totalorder %s23, 3
      %p231 = scmp.ne.s32.totalorder %s226, %s228
      %p232 = scmp.eq.s32.totalorder %s23, 0
      %p233 = por %p231, %p232
      %p234 = scmp.ne.s32.totalorder %s226, %s228
      %p235 = scmp.eq.s32.totalorder %s28, 3
      %p236 = por %p234, %p235
      %p237 = scmp.ne.s32.totalorder %s228, %s229
      %p238 = scmp.eq.s32.totalorder %s28, 0
      %p239 = por %p237, %p238
      %p240 = scmp.ne.s32.totalorder %s228, %s229
      %p241 = scmp.eq.s32.totalorder %s29, 3
      %p242 = por %p240, %p241
      %p244 = scmp.ne.s32.totalorder %s229, %s243
      %p245 = scmp.eq.s32.totalorder %s29, 0
      %p246 = por %p244, %p245
      %s248 = sadd.s32 %s247, 1
      %p251 = scmp.eq.s32.totalorder %s23, 3
      %p252 = scmp.ne.s32.totalorder %s247, %s249
      %p253 = scmp.eq.s32.totalorder %s23, 0
      %p254 = por %p252, %p253
      %p255 = scmp.ne.s32.totalorder %s247, %s249
      %p256 = scmp.eq.s32.totalorder %s28, 3
      %p257 = por %p255, %p256
      %p258 = scmp.ne.s32.totalorder %s249, %s250
      %p259 = scmp.eq.s32.totalorder %s28, 0
      %p260 = por %p258, %p259
      %p261 = scmp.ne.s32.totalorder %s249, %s250
      %p262 = scmp.eq.s32.totalorder %s29, 3
      %p263 = por %p261, %p262
      %p265 = scmp.ne.s32.totalorder %s250, %s264
      %p266 = scmp.eq.s32.totalorder %s29, 0
      %p267 = por %p265, %p266
      %s269 = sadd.s32 %s268, 1
      %p272 = scmp.eq.s32.totalorder %s23, 3
      %p273 = scmp.ne.s32.totalorder %s268, %s270
      %p274 = scmp.eq.s32.totalorder %s23, 0
      %p275 = por %p273, %p274
      %p276 = scmp.ne.s32.totalorder %s268, %s270
      %p277 = scmp.eq.s32.totalorder %s28, 3
      %p278 = por %p276, %p277
      %p279 = scmp.ne.s32.totalorder %s270, %s271
      %p280 = scmp.eq.s32.totalorder %s28, 0
      %p281 = por %p279, %p280
      %p282 = scmp.ne.s32.totalorder %s270, %s271
      %p283 = scmp.eq.s32.totalorder %s29, 3
      %p284 = por %p282, %p283
      %p286 = scmp.ne.s32.totalorder %s271, %s285
      %p287 = scmp.eq.s32.totalorder %s29, 0
      %p288 = por %p286, %p287
      %s290 = sadd.s32 %s289, 1
      %p293 = scmp.eq.s32.totalorder %s23, 3
      %p294 = scmp.ne.s32.totalorder %s289, %s291
      %p295 = scmp.eq.s32.totalorder %s23, 0
      %p296 = por %p294, %p295
      %p297 = scmp.ne.s32.totalorder %s289, %s291
      %p298 = scmp.eq.s32.totalorder %s28, 3
      %p299 = por %p297, %p298
      %p300 = scmp.ne.s32.totalorder %s291, %s292
      %p301 = scmp.eq.s32.totalorder %s28, 0
      %p302 = por %p300, %p301
      %p303 = scmp.ne.s32.totalorder %s291, %s292
      %p304 = scmp.eq.s32.totalorder %s29, 3
      %p305 = por %p303, %p304
      %p307 = scmp.ne.s32.totalorder %s292, %s306
      %p308 = scmp.eq.s32.totalorder %s29, 0
      %p309 = por %p307, %p308
      %s311 = sadd.s32 %s310, 1
      %p314 = scmp.eq.s32.totalorder %s23, 3
      %p315 = scmp.ne.s32.totalorder %s310, %s312
      %p316 = scmp.eq.s32.totalorder %s23, 0
      %p317 = por %p315, %p316
      %p318 = scmp.ne.s32.totalorder %s310, %s312
      %p319 = scmp.eq.s32.totalorder %s28, 3
      %p320 = por %p318, %p319
      %p321 = scmp.ne.s32.totalorder %s312, %s313
      %p322 = scmp.eq.s32.totalorder %s28, 0
      %p323 = por %p321, %p322
      %p324 = scmp.ne.s32.totalorder %s312, %s313
      %p325 = scmp.eq.s32.totalorder %s29, 3
      %p326 = por %p324, %p325
      %p328 = scmp.ne.s32.totalorder %s313, %s327
      %p329 = scmp.eq.s32.totalorder %s29, 0
      %p330 = por %p328, %p329
      %s332 = sadd.s32 %s331, 1
      %p335 = scmp.eq.s32.totalorder %s23, 3
      %p336 = scmp.ne.s32.totalorder %s331, %s333
      %p337 = scmp.eq.s32.totalorder %s23, 0
      %p338 = por %p336, %p337
      %p339 = scmp.ne.s32.totalorder %s331, %s333
      %p340 = scmp.eq.s32.totalorder %s28, 3
      %p341 = por %p339, %p340
      %p342 = scmp.ne.s32.totalorder %s333, %s334
      %p343 = scmp.eq.s32.totalorder %s28, 0
      %p344 = por %p342, %p343
      %p345 = scmp.ne.s32.totalorder %s333, %s334
      %p346 = scmp.eq.s32.totalorder %s29, 3
      %p347 = por %p345, %p346
      %p349 = scmp.ne.s32.totalorder %s334, %s348
      %p350 = scmp.eq.s32.totalorder %s29, 0
      %p351 = por %p349, %p350
      %s352 = ssub.s32 %s30, %s42
      %p353 = scmp.eq.s32.totalorder %s352, 0
      %s355 = sadd.s32 %s354, 1
      %s356 = scalar_select %p353, %s354, %s355
      %p359 = pneg %p353
      %p360 = scmp.eq.s32.totalorder %s23, 3
      %p361 = por %p359, %p360
      %p362 = scmp.ne.s32.totalorder %s354, %s357
      %p363 = scmp.eq.s32.totalorder %s23, 0
      %p364 = por %p362, %p363
      %p365 = scmp.ne.s32.totalorder %s354, %s357
      %p366 = scmp.eq.s32.totalorder %s28, 3
      %p367 = por %p365, %p366
      %p368 = scmp.ne.s32.totalorder %s357, %s358
      %p369 = scmp.eq.s32.totalorder %s28, 0
      %p370 = por %p368, %p369
      %p371 = scmp.ne.s32.totalorder %s357, %s358
      %p372 = scmp.eq.s32.totalorder %s29, 3
      %p373 = por %p371, %p372
      %p375 = scmp.ne.s32.totalorder %s358, %s374
      %p376 = scmp.eq.s32.totalorder %s29, 0
      %p377 = por %p375, %p376
      %p378 = scmp.le.s32.totalorder 1, %s23
      %p379 = scmp.lt.s32.totalorder %s23, 5
      %p380 = pnand %p378, %p379
      %p381 = pneg %p380
      // Predicated region
      $region9: #{tpu_custom_call.1} parent=5 // pred_check
        _
      $region10: #{tpu_custom_call.1} parent=5 // pred_check_branch
        %383 = sbr.rel (%p380) target = $region12
      $region11: #{tpu_custom_call.1} parent=5 // pred_region
        %s384 = ssub.s32 %s23, 1
        // Predicated region
        $region13: #{tpu_custom_call.1} parent=11 // pred_check
          %p385 = pneg %p134
        $region14: #{tpu_custom_call.1} parent=11 // pred_check_branch
          %387 = sbr.rel (%p385) target = $region16
        $region15: #{tpu_custom_call.1} parent=11 // pred_region
          _
        $region16: #{tpu_custom_call.1} parent=11 // pred_fallthru
          _
        // Predicated region
        $region17: #{tpu_custom_call.1} parent=11 // pred_check
          %p388 = pneg %p155
        $region18: #{tpu_custom_call.1} parent=11 // pred_check_branch
          %390 = sbr.rel (%p388) target = $region20
        $region19: #{tpu_custom_call.1} parent=11 // pred_region
          _
        $region20: #{tpu_custom_call.1} parent=11 // pred_fallthru
          _
        // Predicated region
        $region21: #{tpu_custom_call.1} parent=11 // pred_check
          %p391 = pneg %p176
        $region22: #{tpu_custom_call.1} parent=11 // pred_check_branch
          %393 = sbr.rel (%p391) target = $region24
        $region23: #{tpu_custom_call.1} parent=11 // pred_region
          _
        $region24: #{tpu_custom_call.1} parent=11 // pred_fallthru
          _
        // Predicated region
        $region25: #{tpu_custom_call.1} parent=11 // pred_check
          %p394 = pneg %p197
        $region26: #{tpu_custom_call.1} parent=11 // pred_check_branch
          %396 = sbr.rel (%p394) target = $region28
        $region27: #{tpu_custom_call.1} parent=11 // pred_region
          _
        $region28: #{tpu_custom_call.1} parent=11 // pred_fallthru
          _
        // Predicated region
        $region29: #{tpu_custom_call.1} parent=11 // pred_check
          %p397 = pneg %p218
        $region30: #{tpu_custom_call.1} parent=11 // pred_check_branch
          %399 = sbr.rel (%p397) target = $region32
        $region31: #{tpu_custom_call.1} parent=11 // pred_region
          _
        $region32: #{tpu_custom_call.1} parent=11 // pred_fallthru
          _
        // Predicated region
        $region33: #{tpu_custom_call.1} parent=11 // pred_check
          %p400 = pneg %p239
        $region34: #{tpu_custom_call.1} parent=11 // pred_check_branch
          %402 = sbr.rel (%p400) target = $region36
        $region35: #{tpu_custom_call.1} parent=11 // pred_region
          _
        $region36: #{tpu_custom_call.1} parent=11 // pred_fallthru
          _
        // Predicated region
        $region37: #{tpu_custom_call.1} parent=11 // pred_check
          %p403 = pneg %p260
        $region38: #{tpu_custom_call.1} parent=11 // pred_check_branch
          %405 = sbr.rel (%p403) target = $region40
        $region39: #{tpu_custom_call.1} parent=11 // pred_region
          _
        $region40: #{tpu_custom_call.1} parent=11 // pred_fallthru
          _
        // Predicated region
        $region41: #{tpu_custom_call.1} parent=11 // pred_check
          %p406 = pneg %p281
        $region42: #{tpu_custom_call.1} parent=11 // pred_check_branch
          %408 = sbr.rel (%p406) target = $region44
        $region43: #{tpu_custom_call.1} parent=11 // pred_region
          _
        $region44: #{tpu_custom_call.1} parent=11 // pred_fallthru
          _
        // Predicated region
        $region45: #{tpu_custom_call.1} parent=11 // pred_check
          %p409 = pneg %p302
        $region46: #{tpu_custom_call.1} parent=11 // pred_check_branch
          %411 = sbr.rel (%p409) target = $region48
        $region47: #{tpu_custom_call.1} parent=11 // pred_region
          _
        $region48: #{tpu_custom_call.1} parent=11 // pred_fallthru
          _
        // Predicated region
        $region49: #{tpu_custom_call.1} parent=11 // pred_check
          %p412 = pneg %p323
        $region50: #{tpu_custom_call.1} parent=11 // pred_check_branch
          %414 = sbr.rel (%p412) target = $region52
        $region51: #{tpu_custom_call.1} parent=11 // pred_region
          _
        $region52: #{tpu_custom_call.1} parent=11 // pred_fallthru
          _
        // Predicated region
        $region53: #{tpu_custom_call.1} parent=11 // pred_check
          %p415 = pneg %p344
        $region54: #{tpu_custom_call.1} parent=11 // pred_check_branch
          %417 = sbr.rel (%p415) target = $region56
        $region55: #{tpu_custom_call.1} parent=11 // pred_region
          _
        $region56: #{tpu_custom_call.1} parent=11 // pred_fallthru
          _
      $region12: #{tpu_custom_call.1} parent=5 // pred_fallthru
        _
      %p418 = scmp.lt.s32.totalorder %s23, 4
      // Predicated region
      $region57: #{tpu_custom_call.1} parent=5 // pred_check
        %p419 = pneg %p418
      $region58: #{tpu_custom_call.1} parent=5 // pred_check_branch
        %421 = sbr.rel (%p419) target = $region60
      $region59: #{tpu_custom_call.1} parent=5 // pred_region
        // Predicated region
        $region61: #{tpu_custom_call.1} parent=59 // pred_check
          %p422 = pneg %p55
        $region62: #{tpu_custom_call.1} parent=59 // pred_check_branch
          %424 = sbr.rel (%p422) target = $region64
        $region63: #{tpu_custom_call.1} parent=59 // pred_region
          %p425 = scmp.lt.s32.totalorder %s31, 1
          %s426 = scalar_select %p425, %s31, 1
          %s427 = scalar_lea.vmem %s0, %s426
        $region64: #{tpu_custom_call.1} parent=59 // pred_fallthru
          _
        // Predicated region
        $region65: #{tpu_custom_call.1} parent=59 // pred_check
          %p428 = pneg %p81
        $region66: #{tpu_custom_call.1} parent=59 // pred_check_branch
          %430 = sbr.rel (%p428) target = $region68
        $region67: #{tpu_custom_call.1} parent=59 // pred_region
          %s431 = smul.u32 16, %s31
          %p432 = scmp.lt.s32.totalorder %s431, 31
          %s433 = scalar_select %p432, %s431, 31
          %s434 = smul.addr %s433, 8
          %s435 = scalar_lea.vmem %s1, %s434
          %s436 = smul.u32 16, %s31
        $region68: #{tpu_custom_call.1} parent=59 // pred_fallthru
          _
        // Predicated region
        $region69: #{tpu_custom_call.1} parent=59 // pred_check
          %p437 = pneg %p107
        $region70: #{tpu_custom_call.1} parent=59 // pred_check_branch
          %439 = sbr.rel (%p437) target = $region72
        $region71: #{tpu_custom_call.1} parent=59 // pred_region
          %s440 = smul.u32 16, %s31
          %p441 = scmp.lt.s32.totalorder %s440, 31
          %s442 = scalar_select %p441, %s440, 31
          %s443 = smul.addr %s442, 4
          %s444 = scalar_lea.vmem %s2, %s443
          %s445 = smul.u32 16, %s31
        $region72: #{tpu_custom_call.1} parent=59 // pred_fallthru
          _
      $region60: #{tpu_custom_call.1} parent=5 // pred_fallthru
        _
      %p446 = scmp.le.s32.totalorder 1, %s23
      %p447 = scmp.lt.s32.totalorder %s23, 5
      %p448 = pnand %p446, %p447
      %p449 = pneg %p448
      // Predicated region
      $region73: #{tpu_custom_call.1} parent=5 // pred_check
        _
      $region74: #{tpu_custom_call.1} parent=5 // pred_check_branch
        %451 = sbr.rel (%p448) target = $region76
      $region75: #{tpu_custom_call.1} parent=5 // pred_region
        %s452 = ssub.s32 %s23, 1
        %p453 = scmp.lt.s32.totalorder %s33, 1
        %s454 = scalar_select %p453, %s33, 1
        %s455 = scalar_lea.vmem %s0, %s454
        %p456 = pneg %p61
        %p457 = pneg %p58
        %s458 = smul.u32 16, %s33
        %p459 = scmp.lt.s32.totalorder %s458, 31
        %s460 = scalar_select %p459, %s458, 31
        %s461 = smul.addr %s460, 8
        %s462 = scalar_lea.vmem %s1, %s461
        %p463 = pneg %p87
        %p464 = pneg %p84
        %s465 = smul.u32 16, %s33
        %p466 = scmp.lt.s32.totalorder %s465, 31
        %s467 = scalar_select %p466, %s465, 31
        %s468 = smul.addr %s467, 4
        %s469 = scalar_lea.vmem %s2, %s468
        %p470 = pneg %p113
        %p471 = pneg %p110
        %p472 = pneg %p134
        %p473 = pneg %p131
        %p474 = pneg %p155
        %p475 = pneg %p152
        %p476 = pneg %p176
        %p477 = pneg %p173
        %p478 = pneg %p197
        %p479 = pneg %p194
        %p480 = pneg %p218
        %p481 = pneg %p215
        %p482 = pneg %p239
        %p483 = pneg %p236
        %p484 = pneg %p260
        %p485 = pneg %p257
        %p486 = pneg %p281
        %p487 = pneg %p278
        %p488 = pneg %p302
        %p489 = pneg %p299
        %p490 = pneg %p323
        %p491 = pneg %p320
        %p492 = pneg %p344
        %p493 = pneg %p341
        %p494 = pneg %p370
        %p495 = pneg %p367
        %s496 = sand.u32 %s357, 1
        %s497 = scalar_lea.sflag [#allocation6], %s496
        %s498 = sand.u32 %s357, 1
        %s499 = smul.addr %s498, 8
        %s500 = scalar_lea.vmem [#allocation5], %s499
        %p501 = scmp.lt.s32.totalorder %s33, 1
        %s502 = scalar_select %p501, %s33, 1
        %s503 = scalar_lea.vmem %s0, %s502
        %s504 = smul.u32 16, %s33
        %p505 = scmp.lt.s32.totalorder %s504, 31
        %s506 = scalar_select %p505, %s504, 31
        %s507 = smul.addr %s506, 8
        %s508 = scalar_lea.vmem %s1, %s507
        %s509 = smul.u32 16, %s33
        %s510 = smul.u32 16, %s33
        %p511 = scmp.lt.s32.totalorder %s510, 31
        %s512 = scalar_select %p511, %s510, 31
        %s513 = smul.addr %s512, 4
        %s514 = scalar_lea.vmem %s2, %s513
        %s515 = smul.u32 16, %s33
        %s517 = smul.u32 %s32, 8
        %p518 = scmp.eq.s32.totalorder %s33, 0
        // Predicated region
        $region77: #{tpu_custom_call.1} parent=75 // pred_check
          %p519 = pneg %p518
        $region78: #{tpu_custom_call.1} parent=75 // pred_check_branch
          %521 = sbr.rel (%p519) target = $region80
        $region79: #{tpu_custom_call.1} parent=75 // pred_region
          %vm522 = vcmask 31744
          %523 = vst.msk [vmem:[#allocation2] sm:$0xff] %vm522, -1e+30
          %524 = vst [vmem:[#allocation3] sm:$0xff] 0.0
          %525 = vst [vmem:[#allocation4] sm:$0xff] 0.0
        $region80: #{tpu_custom_call.1} parent=75 // pred_fallthru
          _
        %v526 = vld [vmem:[%s514] sm:$0xf]
        %v527 = vld [vmem:[%s514 + $0x4] sm:$0xf]
        %v528 = vld [vmem:[%s514 + $0x8] sm:$0xf]
        %v529 = vld [vmem:[%s514 + $0xc] sm:$0xf]
        %v530 = vld [vmem:[%s514 + $0x10] sm:$0xf]
        %v531 = vld [vmem:[%s514 + $0x14] sm:$0xf]
        %v532 = vld [vmem:[%s514 + $0x18] sm:$0xf]
        %v533 = vld [vmem:[%s514 + $0x1c] sm:$0xf]
        %v534 = vld [vmem:[%s514 + $0x20] sm:$0xf]
        %v535 = vld [vmem:[%s514 + $0x24] sm:$0xf]
        %v536 = vld [vmem:[%s514 + $0x28] sm:$0xf]
        %v537 = vld [vmem:[%s514 + $0x2c] sm:$0xf]
        %v538 = vld [vmem:[%s514 + $0x30] sm:$0xf]
        %v539 = vld [vmem:[%s514 + $0x34] sm:$0xf]
        %v540 = vld [vmem:[%s514 + $0x38] sm:$0xf]
        %v541 = vld [vmem:[%s514 + $0x3c] sm:$0xf]
        %v542 = vld [vmem:[%s3] sm:$0xf]
        %v543 = vld [vmem:[%s3 + $0x4] sm:$0xf]
        %v544 = vld [vmem:[%s3 + $0x8] sm:$0xf]
        %v545 = vld [vmem:[%s3 + $0xc] sm:$0xf]
        %v562 = vunpack.c.l.b16 %v526
        %v563 = vunpack.c.l.b16 %v527
        %v564 = vunpack.c.l.b16 %v528
        %v565 = vunpack.c.l.b16 %v529
        %v566 = vunpack.c.l.b16 %v530
        %v567 = vunpack.c.l.b16 %v531
        %v568 = vunpack.c.l.b16 %v532
        %v569 = vunpack.c.l.b16 %v533
        %v570 = vunpack.c.l.b16 %v534
        %v571 = vunpack.c.l.b16 %v535
        %v572 = vunpack.c.l.b16 %v536
        %v573 = vunpack.c.l.b16 %v537
        %v574 = vunpack.c.l.b16 %v538
        %v575 = vunpack.c.l.b16 %v539
        %v576 = vunpack.c.l.b16 %v540
        %v577 = vunpack.c.l.b16 %v541
        %v578 = vpack.c.b16 %v563, %v562
        %v579 = vpack.c.b16 %v565, %v564
        %v580 = vpack.c.b16 %v567, %v566
        %v581 = vpack.c.b16 %v569, %v568
        %v582 = vpack.c.b16 %v571, %v570
        %v583 = vpack.c.b16 %v573, %v572
        %v584 = vpack.c.b16 %v575, %v574
        %v585 = vpack.c.b16 %v577, %v576
        %v590 = vunpack.c.l.b16 %v542
        %v591 = vunpack.c.l.b16 %v543
        %v592 = vunpack.c.l.b16 %v544
        %v593 = vunpack.c.l.b16 %v545
        %v594 = vpack.c.b16 %v591, %v590
        %v595 = vpack.c.b16 %v593, %v592
        %vm598 = vcmask 261120
        %v600 = vsel %vm598, %v578, 0
        %v603 = vsel %vm598, %v579, 0
        %v606 = vsel %vm598, %v580, 0
        %v609 = vsel %vm598, %v581, 0
        %v612 = vsel %vm598, %v582, 0
        %v615 = vsel %vm598, %v583, 0
        %v618 = vsel %vm598, %v584, 0
        %v621 = vsel %vm598, %v585, 0
        %623 = vmatpush.bf16.msra.mxu0 0
        %624 = vmatpush.bf16.msra.mxu0 0
        %625 = vmatpush.bf16.msra.mxu0 0
        %626 = vmatpush.bf16.msra.mxu0 0
        %627 = vmatpush.bf16.msra.mxu0 0
        %628 = vmatpush.bf16.msra.mxu0 0
        %629 = vmatpush.bf16.msra.mxu0 %v595
        %630 = vmatpush.bf16.msra.mxu0 %v594
        %631 = vmatmul.bf16.gmra.mxu0 %v600
        %v632 = vpop.f32.mrf.mxu0
        %v633 = vadd.f32 0.0, %v632
        %v634 = vpop.f32.mrf.mxu0
        %v635 = vadd.f32 0.0, %v634
        %636 = vmatmul.bf16.gmra.mxu0 %v603
        %v637 = vpop.f32.mrf.mxu0
        %v638 = vadd.f32 0.0, %v637
        %v639 = vpop.f32.mrf.mxu0
        %v640 = vadd.f32 0.0, %v639
        %641 = vmatmul.bf16.gmra.mxu0 %v606
        %v642 = vpop.f32.mrf.mxu0
        %v643 = vadd.f32 0.0, %v642
        %v644 = vpop.f32.mrf.mxu0
        %v645 = vadd.f32 0.0, %v644
        %646 = vmatmul.bf16.gmra.mxu0 %v609
        %v647 = vpop.f32.mrf.mxu0
        %v648 = vadd.f32 0.0, %v647
        %v649 = vpop.f32.mrf.mxu0
        %v650 = vadd.f32 0.0, %v649
        %651 = vmatmul.bf16.gmra.mxu0 %v612
        %v652 = vpop.f32.mrf.mxu0
        %v653 = vadd.f32 0.0, %v652
        %v654 = vpop.f32.mrf.mxu0
        %v655 = vadd.f32 0.0, %v654
        %656 = vmatmul.bf16.gmra.mxu0 %v615
        %v657 = vpop.f32.mrf.mxu0
        %v658 = vadd.f32 0.0, %v657
        %v659 = vpop.f32.mrf.mxu0
        %v660 = vadd.f32 0.0, %v659
        %661 = vmatmul.bf16.gmra.mxu0 %v618
        %v662 = vpop.f32.mrf.mxu0
        %v663 = vadd.f32 0.0, %v662
        %v664 = vpop.f32.mrf.mxu0
        %v665 = vadd.f32 0.0, %v664
        %666 = vmatmul.bf16.gmra.mxu0 %v621
        %v667 = vpop.f32.mrf.mxu0
        %v668 = vadd.f32 0.0, %v667
        %v669 = vpop.f32.mrf.mxu0
        %v670 = vadd.f32 0.0, %v669
        %671 = vdwg.mxu0
        %v672 = vld [vmem:[%s4] sm:$0x1]
        %v674 = vperm.slane %v672, 0
        %v676 = vadd.f32 %v633, %v674
        %v677 = vadd.f32 %v635, %v674
        %v678 = vadd.f32 %v638, %v674
        %v679 = vadd.f32 %v640, %v674
        %v680 = vadd.f32 %v643, %v674
        %v681 = vadd.f32 %v645, %v674
        %v682 = vadd.f32 %v648, %v674
        %v683 = vadd.f32 %v650, %v674
        %v684 = vadd.f32 %v653, %v674
        %v685 = vadd.f32 %v655, %v674
        %v686 = vadd.f32 %v658, %v674
        %v687 = vadd.f32 %v660, %v674
        %v688 = vadd.f32 %v663, %v674
        %v689 = vadd.f32 %v665, %v674
        %v690 = vadd.f32 %v668, %v674
        %v691 = vadd.f32 %v670, %v674
        %v692 = vld [vmem:[%s5] sm:$0x1]
        %v694 = vperm.slane %v692, 0
        %v696 = vadd.f32 %v633, %v694
        %v697 = vadd.f32 %v635, %v694
        %v698 = vadd.f32 %v638, %v694
        %v699 = vadd.f32 %v640, %v694
        %v700 = vadd.f32 %v643, %v694
        %v701 = vadd.f32 %v645, %v694
        %v702 = vadd.f32 %v648, %v694
        %v703 = vadd.f32 %v650, %v694
        %v704 = vadd.f32 %v653, %v694
        %v705 = vadd.f32 %v655, %v694
        %v706 = vadd.f32 %v658, %v694
        %v707 = vadd.f32 %v660, %v694
        %v708 = vadd.f32 %v663, %v694
        %v709 = vadd.f32 %v665, %v694
        %v710 = vadd.f32 %v668, %v694
        %v711 = vadd.f32 %v670, %v694
        %vm712 = vcmp.gt.f32.partialorder %v696, 0.0
        %vm713 = vcmp.gt.f32.partialorder %v697, 0.0
        %vm714 = vcmp.gt.f32.partialorder %v698, 0.0
        %vm715 = vcmp.gt.f32.partialorder %v699, 0.0
        %vm716 = vcmp.gt.f32.partialorder %v700, 0.0
        %vm717 = vcmp.gt.f32.partialorder %v701, 0.0
        %vm718 = vcmp.gt.f32.partialorder %v702, 0.0
        %vm719 = vcmp.gt.f32.partialorder %v703, 0.0
        %vm720 = vcmp.gt.f32.partialorder %v704, 0.0
        %vm721 = vcmp.gt.f32.partialorder %v705, 0.0
        %vm722 = vcmp.gt.f32.partialorder %v706, 0.0
        %vm723 = vcmp.gt.f32.partialorder %v707, 0.0
        %vm724 = vcmp.gt.f32.partialorder %v708, 0.0
        %vm725 = vcmp.gt.f32.partialorder %v709, 0.0
        %vm726 = vcmp.gt.f32.partialorder %v710, 0.0
        %vm727 = vcmp.gt.f32.partialorder %v711, 0.0
        %v728 = vmul.f32 %v696, 0.2
        %v729 = vmul.f32 %v697, 0.2
        %v730 = vmul.f32 %v698, 0.2
        %v731 = vmul.f32 %v699, 0.2
        %v732 = vmul.f32 %v700, 0.2
        %v733 = vmul.f32 %v701, 0.2
        %v734 = vmul.f32 %v702, 0.2
        %v735 = vmul.f32 %v703, 0.2
        %v736 = vmul.f32 %v704, 0.2
        %v737 = vmul.f32 %v705, 0.2
        %v738 = vmul.f32 %v706, 0.2
        %v739 = vmul.f32 %v707, 0.2
        %v740 = vmul.f32 %v708, 0.2
        %v741 = vmul.f32 %v709, 0.2
        %v742 = vmul.f32 %v710, 0.2
        %v743 = vmul.f32 %v711, 0.2
        %v744 = vsel %vm712, %v696, %v728
        %v745 = vsel %vm713, %v697, %v729
        %v746 = vsel %vm714, %v698, %v730
        %v747 = vsel %vm715, %v699, %v731
        %v748 = vsel %vm716, %v700, %v732
        %v749 = vsel %vm717, %v701, %v733
        %v750 = vsel %vm718, %v702, %v734
        %v751 = vsel %vm719, %v703, %v735
        %v752 = vsel %vm720, %v704, %v736
        %v753 = vsel %vm721, %v705, %v737
        %v754 = vsel %vm722, %v706, %v738
        %v755 = vsel %vm723, %v707, %v739
        %v756 = vsel %vm724, %v708, %v740
        %v757 = vsel %vm725, %v709, %v741
        %v758 = vsel %vm726, %v710, %v742
        %v759 = vsel %vm727, %v711, %v743
        %v760 = vpack.c.bf16 %v745, %v744
        %v761 = vpack.c.bf16 %v747, %v746
        %v762 = vpack.c.bf16 %v749, %v748
        %v763 = vpack.c.bf16 %v751, %v750
        %v764 = vpack.c.bf16 %v753, %v752
        %v765 = vpack.c.bf16 %v755, %v754
        %v766 = vpack.c.bf16 %v757, %v756
        %v767 = vpack.c.bf16 %v759, %v758
        %v768 = vld [vmem:[%s6] sm:$0xf]
        %v769 = vld [vmem:[%s6 + $0x4] sm:$0xf]
        %v770 = vld [vmem:[%s6 + $0x8] sm:$0xf]
        %v771 = vld [vmem:[%s6 + $0xc] sm:$0xf]
        %v772 = vld [vmem:[%s6 + $0x10] sm:$0xf]
        %v773 = vld [vmem:[%s6 + $0x14] sm:$0xf]
        %v774 = vld [vmem:[%s6 + $0x18] sm:$0xf]
        %v775 = vld [vmem:[%s6 + $0x1c] sm:$0xf]
        %v776 = vld [vmem:[%s6 + $0x20] sm:$0xf]
        %v777 = vld [vmem:[%s6 + $0x24] sm:$0xf]
        %v778 = vld [vmem:[%s6 + $0x28] sm:$0xf]
        %v779 = vld [vmem:[%s6 + $0x2c] sm:$0xf]
        %v780 = vld [vmem:[%s6 + $0x30] sm:$0xf]
        %v781 = vld [vmem:[%s6 + $0x34] sm:$0xf]
        %v782 = vld [vmem:[%s6 + $0x38] sm:$0xf]
        %v783 = vld [vmem:[%s6 + $0x3c] sm:$0xf]
        %v800 = vunpack.c.l.b16 %v768
        %v801 = vunpack.c.l.b16 %v769
        %v802 = vunpack.c.l.b16 %v770
        %v803 = vunpack.c.l.b16 %v771
        %v804 = vunpack.c.l.b16 %v772
        %v805 = vunpack.c.l.b16 %v773
        %v806 = vunpack.c.l.b16 %v774
        %v807 = vunpack.c.l.b16 %v775
        %v808 = vunpack.c.l.b16 %v776
        %v809 = vunpack.c.l.b16 %v777
        %v810 = vunpack.c.l.b16 %v778
        %v811 = vunpack.c.l.b16 %v779
        %v812 = vunpack.c.l.b16 %v780
        %v813 = vunpack.c.l.b16 %v781
        %v814 = vunpack.c.l.b16 %v782
        %v815 = vunpack.c.l.b16 %v783
        %v816 = vpack.c.b16 %v801, %v800
        %v817 = vpack.c.b16 %v803, %v802
        %v818 = vpack.c.b16 %v805, %v804
        %v819 = vpack.c.b16 %v807, %v806
        %v820 = vpack.c.b16 %v809, %v808
        %v821 = vpack.c.b16 %v811, %v810
        %v822 = vpack.c.b16 %v813, %v812
        %v823 = vpack.c.b16 %v815, %v814
        %832 = vmatpush.bf16.msra.mxu0 %v823
        %833 = vmatpush.bf16.msra.mxu0 %v822
        %834 = vmatpush.bf16.msra.mxu0 %v821
        %835 = vmatpush.bf16.msra.mxu0 %v820
        %836 = vmatpush.bf16.msra.mxu0 %v819
        %837 = vmatpush.bf16.msra.mxu0 %v818
        %838 = vmatpush.bf16.msra.mxu0 %v817
        %839 = vmatpush.bf16.msra.mxu0 %v816
        %840 = vmatmul.bf16.gmra.mxu0 %v760
        %v841 = vpop.f32.mrf.mxu0
        %v842 = vadd.f32 0.0, %v841
        %v843 = vpop.f32.mrf.mxu0
        %v844 = vadd.f32 0.0, %v843
        %845 = vmatmul.bf16.gmra.mxu0 %v761
        %v846 = vpop.f32.mrf.mxu0
        %v847 = vadd.f32 0.0, %v846
        %v848 = vpop.f32.mrf.mxu0
        %v849 = vadd.f32 0.0, %v848
        %850 = vmatmul.bf16.gmra.mxu0 %v762
        %v851 = vpop.f32.mrf.mxu0
        %v852 = vadd.f32 0.0, %v851
        %v853 = vpop.f32.mrf.mxu0
        %v854 = vadd.f32 0.0, %v853
        %855 = vmatmul.bf16.gmra.mxu0 %v763
        %v856 = vpop.f32.mrf.mxu0
        %v857 = vadd.f32 0.0, %v856
        %v858 = vpop.f32.mrf.mxu0
        %v859 = vadd.f32 0.0, %v858
        %860 = vmatmul.bf16.gmra.mxu0 %v764
        %v861 = vpop.f32.mrf.mxu0
        %v862 = vadd.f32 0.0, %v861
        %v863 = vpop.f32.mrf.mxu0
        %v864 = vadd.f32 0.0, %v863
        %865 = vmatmul.bf16.gmra.mxu0 %v765
        %v866 = vpop.f32.mrf.mxu0
        %v867 = vadd.f32 0.0, %v866
        %v868 = vpop.f32.mrf.mxu0
        %v869 = vadd.f32 0.0, %v868
        %870 = vmatmul.bf16.gmra.mxu0 %v766
        %v871 = vpop.f32.mrf.mxu0
        %v872 = vadd.f32 0.0, %v871
        %v873 = vpop.f32.mrf.mxu0
        %v874 = vadd.f32 0.0, %v873
        %875 = vmatmul.bf16.gmra.mxu0 %v767
        %v876 = vpop.f32.mrf.mxu0
        %v877 = vadd.f32 0.0, %v876
        %v878 = vpop.f32.mrf.mxu0
        %v879 = vadd.f32 0.0, %v878
        %880 = vdwg.mxu0
        %v881 = vld [vmem:[%s503] sm:$0x1]
        %v882 = vld [vmem:[%s508] sm:$0xff]
        %v883 = vld [vmem:[%s508 + $0x8] sm:$0xff]
        %v884 = vld [vmem:[%s508 + $0x10] sm:$0xff]
        %v885 = vld [vmem:[%s508 + $0x18] sm:$0xff]
        %v886 = vld [vmem:[%s508 + $0x20] sm:$0xff]
        %v887 = vld [vmem:[%s508 + $0x28] sm:$0xff]
        %v888 = vld [vmem:[%s508 + $0x30] sm:$0xff]
        %v889 = vld [vmem:[%s508 + $0x38] sm:$0xff]
        %v890 = vld [vmem:[%s508 + $0x40] sm:$0xff]
        %v891 = vld [vmem:[%s508 + $0x48] sm:$0xff]
        %v892 = vld [vmem:[%s508 + $0x50] sm:$0xff]
        %v893 = vld [vmem:[%s508 + $0x58] sm:$0xff]
        %v894 = vld [vmem:[%s508 + $0x60] sm:$0xff]
        %v895 = vld [vmem:[%s508 + $0x68] sm:$0xff]
        %v896 = vld [vmem:[%s508 + $0x70] sm:$0xff]
        %v897 = vld [vmem:[%s508 + $0x78] sm:$0xff]
        %v898 = vlaneseq
        %v899 = vshrl.u32 %v898, 7
        %v900 = vstv %s517
        %v901 = vadd.s32 %v899, %v900
        %v902 = vlaneseq
        %v903 = vand.u32 %v902, 127
        %v904 = vadd.s32 %v903, %v900
        %v905 = vperm.slane %v881, 0
        %vm906 = vcmp.eq.s32.totalorder %v901, %v905
        %907 = vset.pattern.permute.xlu0 0
        %908 = vperm.xlu0 %907, %v882
        %v909 = vpop.permute.xlu0 %908
        %910 = vset.pattern.permute.xlu0 0
        %911 = vperm.xlu0 %910, %v883
        %v912 = vpop.permute.xlu0 %911
        %913 = vset.pattern.permute.xlu0 0
        %914 = vperm.xlu0 %913, %v884
        %v915 = vpop.permute.xlu0 %914
        %916 = vset.pattern.permute.xlu0 0
        %917 = vperm.xlu0 %916, %v885
        %v918 = vpop.permute.xlu0 %917
        %919 = vset.pattern.permute.xlu0 0
        %920 = vperm.xlu0 %919, %v886
        %v921 = vpop.permute.xlu0 %920
        %922 = vset.pattern.permute.xlu0 0
        %923 = vperm.xlu0 %922, %v887
        %v924 = vpop.permute.xlu0 %923
        %925 = vset.pattern.permute.xlu0 0
        %926 = vperm.xlu0 %925, %v888
        %v927 = vpop.permute.xlu0 %926
        %928 = vset.pattern.permute.xlu0 0
        %929 = vperm.xlu0 %928, %v889
        %v930 = vpop.permute.xlu0 %929
        %931 = vset.pattern.permute.xlu0 0
        %932 = vperm.xlu0 %931, %v890
        %v933 = vpop.permute.xlu0 %932
        %934 = vset.pattern.permute.xlu0 0
        %935 = vperm.xlu0 %934, %v891
        %v936 = vpop.permute.xlu0 %935
        %937 = vset.pattern.permute.xlu0 0
        %938 = vperm.xlu0 %937, %v892
        %v939 = vpop.permute.xlu0 %938
        %940 = vset.pattern.permute.xlu0 0
        %941 = vperm.xlu0 %940, %v893
        %v942 = vpop.permute.xlu0 %941
        %943 = vset.pattern.permute.xlu0 0
        %944 = vperm.xlu0 %943, %v894
        %v945 = vpop.permute.xlu0 %944
        %946 = vset.pattern.permute.xlu0 0
        %947 = vperm.xlu0 %946, %v895
        %v948 = vpop.permute.xlu0 %947
        %949 = vset.pattern.permute.xlu0 0
        %950 = vperm.xlu0 %949, %v896
        %v951 = vpop.permute.xlu0 %950
        %952 = vset.pattern.permute.xlu0 0
        %953 = vperm.xlu0 %952, %v897
        %v954 = vpop.permute.xlu0 %953
        %vm955 = vcmp.eq.s32.totalorder %v904, %v909
        %vm956 = vcmp.eq.s32.totalorder %v904, %v912
        %vm957 = vcmp.eq.s32.totalorder %v904, %v915
        %vm958 = vcmp.eq.s32.totalorder %v904, %v918
        %vm959 = vcmp.eq.s32.totalorder %v904, %v921
        %vm960 = vcmp.eq.s32.totalorder %v904, %v924
        %vm961 = vcmp.eq.s32.totalorder %v904, %v927
        %vm962 = vcmp.eq.s32.totalorder %v904, %v930
        %vm963 = vcmp.eq.s32.totalorder %v904, %v933
        %vm964 = vcmp.eq.s32.totalorder %v904, %v936
        %vm965 = vcmp.eq.s32.totalorder %v904, %v939
        %vm966 = vcmp.eq.s32.totalorder %v904, %v942
        %vm967 = vcmp.eq.s32.totalorder %v904, %v945
        %vm968 = vcmp.eq.s32.totalorder %v904, %v948
        %vm969 = vcmp.eq.s32.totalorder %v904, %v951
        %vm970 = vcmp.eq.s32.totalorder %v904, %v954
        %v971 = vsel %vm906, 1, 0
        %v972 = vcvt.s32.f32 %v971
        %v973 = vpack.c.bf16 %v972, %v972
        %v974 = vsel %vm955, 1, 0
        %v975 = vsel %vm956, 1, 0
        %v976 = vsel %vm957, 1, 0
        %v977 = vsel %vm958, 1, 0
        %v978 = vsel %vm959, 1, 0
        %v979 = vsel %vm960, 1, 0
        %v980 = vsel %vm961, 1, 0
        %v981 = vsel %vm962, 1, 0
        %v982 = vsel %vm963, 1, 0
        %v983 = vsel %vm964, 1, 0
        %v984 = vsel %vm965, 1, 0
        %v985 = vsel %vm966, 1, 0
        %v986 = vsel %vm967, 1, 0
        %v987 = vsel %vm968, 1, 0
        %v988 = vsel %vm969, 1, 0
        %v989 = vsel %vm970, 1, 0
        %v990 = vcvt.s32.f32 %v974
        %v991 = vcvt.s32.f32 %v975
        %v992 = vcvt.s32.f32 %v976
        %v993 = vcvt.s32.f32 %v977
        %v994 = vcvt.s32.f32 %v978
        %v995 = vcvt.s32.f32 %v979
        %v996 = vcvt.s32.f32 %v980
        %v997 = vcvt.s32.f32 %v981
        %v998 = vcvt.s32.f32 %v982
        %v999 = vcvt.s32.f32 %v983
        %v1000 = vcvt.s32.f32 %v984
        %v1001 = vcvt.s32.f32 %v985
        %v1002 = vcvt.s32.f32 %v986
        %v1003 = vcvt.s32.f32 %v987
        %v1004 = vcvt.s32.f32 %v988
        %v1005 = vcvt.s32.f32 %v989
        %vm1006 = vcmp.ge.s32.totalorder %v882, %v900
        %vm1007 = vcmp.ge.s32.totalorder %v883, %v900
        %vm1008 = vcmp.ge.s32.totalorder %v884, %v900
        %vm1009 = vcmp.ge.s32.totalorder %v885, %v900
        %vm1010 = vcmp.ge.s32.totalorder %v886, %v900
        %vm1011 = vcmp.ge.s32.totalorder %v887, %v900
        %vm1012 = vcmp.ge.s32.totalorder %v888, %v900
        %vm1013 = vcmp.ge.s32.totalorder %v889, %v900
        %vm1014 = vcmp.ge.s32.totalorder %v890, %v900
        %vm1015 = vcmp.ge.s32.totalorder %v891, %v900
        %vm1016 = vcmp.ge.s32.totalorder %v892, %v900
        %vm1017 = vcmp.ge.s32.totalorder %v893, %v900
        %vm1018 = vcmp.ge.s32.totalorder %v894, %v900
        %vm1019 = vcmp.ge.s32.totalorder %v895, %v900
        %vm1020 = vcmp.ge.s32.totalorder %v896, %v900
        %vm1021 = vcmp.ge.s32.totalorder %v897, %v900
        %s1022 = sadd.s32 %s517, 8
        %v1023 = vstv %s1022
        %vm1024 = vcmp.lt.s32.totalorder %v882, %v1023
        %vm1025 = vcmp.lt.s32.totalorder %v883, %v1023
        %vm1026 = vcmp.lt.s32.totalorder %v884, %v1023
        %vm1027 = vcmp.lt.s32.totalorder %v885, %v1023
        %vm1028 = vcmp.lt.s32.totalorder %v886, %v1023
        %vm1029 = vcmp.lt.s32.totalorder %v887, %v1023
        %vm1030 = vcmp.lt.s32.totalorder %v888, %v1023
        %vm1031 = vcmp.lt.s32.totalorder %v889, %v1023
        %vm1032 = vcmp.lt.s32.totalorder %v890, %v1023
        %vm1033 = vcmp.lt.s32.totalorder %v891, %v1023
        %vm1034 = vcmp.lt.s32.totalorder %v892, %v1023
        %vm1035 = vcmp.lt.s32.totalorder %v893, %v1023
        %vm1036 = vcmp.lt.s32.totalorder %v894, %v1023
        %vm1037 = vcmp.lt.s32.totalorder %v895, %v1023
        %vm1038 = vcmp.lt.s32.totalorder %v896, %v1023
        %vm1039 = vcmp.lt.s32.totalorder %v897, %v1023
        %vm1040 = vmand %vm1006, %vm1024
        %vm1041 = vmand %vm1007, %vm1025
        %vm1042 = vmand %vm1008, %vm1026
        %vm1043 = vmand %vm1009, %vm1027
        %vm1044 = vmand %vm1010, %vm1028
        %vm1045 = vmand %vm1011, %vm1029
        %vm1046 = vmand %vm1012, %vm1030
        %vm1047 = vmand %vm1013, %vm1031
        %vm1048 = vmand %vm1014, %vm1032
        %vm1049 = vmand %vm1015, %vm1033
        %vm1050 = vmand %vm1016, %vm1034
        %vm1051 = vmand %vm1017, %vm1035
        %vm1052 = vmand %vm1018, %vm1036
        %vm1053 = vmand %vm1019, %vm1037
        %vm1054 = vmand %vm1020, %vm1038
        %vm1055 = vmand %vm1021, %vm1039
        %1056 = vxpose.xlu0.b32.start [1/16] %v842, 128
        %1057 = vxpose.xlu0.b32.cont [2/16] %v844, 128
        %1058 = vxpose.xlu0.b32.cont [3/16] %v847, 128
        %1059 = vxpose.xlu0.b32.cont [4/16] %v849, 128
        %1060 = vxpose.xlu0.b32.cont [5/16] %v852, 128
        %1061 = vxpose.xlu0.b32.cont [6/16] %v854, 128
        %1062 = vxpose.xlu0.b32.cont [7/16] %v857, 128
        %1063 = vxpose.xlu0.b32.cont [8/16] %v859, 128
        %1064 = vxpose.xlu0.b32.cont [9/16] %v862, 128
        %1065 = vxpose.xlu0.b32.cont [10/16] %v864, 128
        %1066 = vxpose.xlu0.b32.cont [11/16] %v867, 128
        %1067 = vxpose.xlu0.b32.cont [12/16] %v869, 128
        %1068 = vxpose.xlu0.b32.cont [13/16] %v872, 128
        %1069 = vxpose.xlu0.b32.cont [14/16] %v874, 128
        %1070 = vxpose.xlu0.b32.cont [15/16] %v877, 128
        %1071 = vxpose.xlu0.b32.end [16/16] %v879, 128
        %v1072 = vpop.trf.xlu0
        %v1073 = vpop.trf.xlu0
        %v1074 = vpop.trf.xlu0
        %v1075 = vpop.trf.xlu0
        %v1076 = vpop.trf.xlu0
        %v1077 = vpop.trf.xlu0
        %v1078 = vpop.trf.xlu0
        %v1079 = vpop.trf.xlu0
        %v1080 = vpop.trf.xlu0
        %v1081 = vpop.trf.xlu0
        %v1082 = vpop.trf.xlu0
        %v1083 = vpop.trf.xlu0
        %v1084 = vpop.trf.xlu0
        %v1085 = vpop.trf.xlu0
        %v1086 = vpop.trf.xlu0
        %v1087 = vpop.trf.xlu0
        %v1088 = vperm.slane %v1072, 0
        %v1089 = vsel %vm906, %v1088, -1e+30
        %1090 = vmax.xlane.f32.xlu0 %v1089
        %v1091 = vpop.xlane.xlu0 %1090
        %v1092 = vperm.slane %v1072, 1
        %v1093 = vsel %vm906, %v1092, -1e+30
        %1094 = vmax.xlane.f32.xlu0 %v1093
        %v1095 = vpop.xlane.xlu0 %1094
        %v1096 = vperm.slane %v1072, 2
        %v1097 = vsel %vm906, %v1096, -1e+30
        %1098 = vmax.xlane.f32.xlu0 %v1097
        %v1099 = vpop.xlane.xlu0 %1098
        %v1100 = vperm.slane %v1072, 3
        %v1101 = vsel %vm906, %v1100, -1e+30
        %1102 = vmax.xlane.f32.xlu0 %v1101
        %v1103 = vpop.xlane.xlu0 %1102
        %vm1104 = vcmask 7168
        %v1105 = vsel %vm1104, %v1091, %v1095
        %vm1106 = vcmask 15360
        %v1107 = vsel %vm1106, %v1105, %v1099
        %vm1108 = vcmask 23552
        %v1109 = vsel %vm1108, %v1107, %v1103
        %v1110 = vld [vmem:[#allocation2] sm:$0xff]
        %v1111 = vmax.f32 %v1110, %v1109
        %v1112 = vsub.f32 %v1110, %v1111
        %v1113 = vmul.f32 %v1112, 1.442695
        %v1114 = vpow.pop %v1113
        %1116 = vset.pattern.permute.xlu0 0
        %1117 = vperm.xlu0 %1116, %v1114
        %v1118 = vpop.permute.xlu0 %1117
        %1120 = vset.pattern.permute.xlu0 1
        %1121 = vperm.xlu0 %1120, %v1114
        %v1122 = vpop.permute.xlu0 %1121
        %1124 = vset.pattern.permute.xlu0 2
        %1125 = vperm.xlu0 %1124, %v1114
        %v1126 = vpop.permute.xlu0 %1125
        %1128 = vset.pattern.permute.xlu0 3
        %1129 = vperm.xlu0 %1128, %v1114
        %v1130 = vpop.permute.xlu0 %1129
        %v1132 = vsel %vm598, %v1118, %v1122
        %vm1133 = vcmask 523264
        %v1134 = vsel %vm1133, %v1132, %v1126
        %vm1135 = vcmask 785408
        %v1136 = vsel %vm1135, %v1134, %v1130
        %vm1137 = vcmask 64512
        %v1139 = vsel %vm1137, %v990, 0
        %v1142 = vsel %vm1137, %v991, 0
        %v1145 = vsel %vm1137, %v992, 0
        %v1148 = vsel %vm1137, %v993, 0
        %v1151 = vsel %vm1137, %v994, 0
        %v1154 = vsel %vm1137, %v995, 0
        %v1157 = vsel %vm1137, %v996, 0
        %v1160 = vsel %vm1137, %v997, 0
        %v1163 = vsel %vm1137, %v998, 0
        %v1166 = vsel %vm1137, %v999, 0
        %v1169 = vsel %vm1137, %v1000, 0
        %v1172 = vsel %vm1137, %v1001, 0
        %v1175 = vsel %vm1137, %v1002, 0
        %v1178 = vsel %vm1137, %v1003, 0
        %v1181 = vsel %vm1137, %v1004, 0
        %v1184 = vsel %vm1137, %v1005, 0
        %1186 = vmatpush.msra.mxu0 0.0
        %1187 = vmatpush.msra.mxu0 0.0
        %1188 = vmatpush.msra.mxu0 0.0
        %1189 = vmatpush.msra.mxu0 0.0
        %1190 = vmatpush.msra.mxu0 0.0
        %1191 = vmatpush.msra.mxu0 0.0
        %1192 = vmatpush.msra.mxu0 0.0
        %1193 = vmatpush.msra.mxu0 0.0
        %1194 = vmatpush.msra.mxu0 0.0
        %1195 = vmatpush.msra.mxu0 0.0
        %1196 = vmatpush.msra.mxu0 0.0
        %1197 = vmatpush.msra.mxu0 0.0
        %1198 = vmatpush.msra.mxu0 0.0
        %1199 = vmatpush.msra.mxu0 0.0
        %1200 = vmatpush.msra.mxu0 0.0
        %1201 = vmatpush.msra.mxu0 %v1111
        %1202 = vmatmul.f32.gmra.mxu0 %v1139
        %v1203 = vpop.f32.mrf.mxu0
        %v1204 = vadd.f32 0.0, %v1203
        %1205 = vmatmul.f32.gmra.mxu0 %v1142
        %v1206 = vpop.f32.mrf.mxu0
        %v1207 = vadd.f32 0.0, %v1206
        %1208 = vmatmul.f32.gmra.mxu0 %v1145
        %v1209 = vpop.f32.mrf.mxu0
        %v1210 = vadd.f32 0.0, %v1209
        %1211 = vmatmul.f32.gmra.mxu0 %v1148
        %v1212 = vpop.f32.mrf.mxu0
        %v1213 = vadd.f32 0.0, %v1212
        %1214 = vmatmul.f32.gmra.mxu0 %v1151
        %v1215 = vpop.f32.mrf.mxu0
        %v1216 = vadd.f32 0.0, %v1215
        %1217 = vmatmul.f32.gmra.mxu0 %v1154
        %v1218 = vpop.f32.mrf.mxu0
        %v1219 = vadd.f32 0.0, %v1218
        %1220 = vmatmul.f32.gmra.mxu0 %v1157
        %v1221 = vpop.f32.mrf.mxu0
        %v1222 = vadd.f32 0.0, %v1221
        %1223 = vmatmul.f32.gmra.mxu0 %v1160
        %v1224 = vpop.f32.mrf.mxu0
        %v1225 = vadd.f32 0.0, %v1224
        %1226 = vmatmul.f32.gmra.mxu0 %v1163
        %v1227 = vpop.f32.mrf.mxu0
        %v1228 = vadd.f32 0.0, %v1227
        %1229 = vmatmul.f32.gmra.mxu0 %v1166
        %v1230 = vpop.f32.mrf.mxu0
        %v1231 = vadd.f32 0.0, %v1230
        %1232 = vmatmul.f32.gmra.mxu0 %v1169
        %v1233 = vpop.f32.mrf.mxu0
        %v1234 = vadd.f32 0.0, %v1233
        %1235 = vmatmul.f32.gmra.mxu0 %v1172
        %v1236 = vpop.f32.mrf.mxu0
        %v1237 = vadd.f32 0.0, %v1236
        %1238 = vmatmul.f32.gmra.mxu0 %v1175
        %v1239 = vpop.f32.mrf.mxu0
        %v1240 = vadd.f32 0.0, %v1239
        %1241 = vmatmul.f32.gmra.mxu0 %v1178
        %v1242 = vpop.f32.mrf.mxu0
        %v1243 = vadd.f32 0.0, %v1242
        %1244 = vmatmul.f32.gmra.mxu0 %v1181
        %v1245 = vpop.f32.mrf.mxu0
        %v1246 = vadd.f32 0.0, %v1245
        %1247 = vmatmul.f32.gmra.mxu0 %v1184
        %v1248 = vpop.f32.mrf.mxu0
        %v1249 = vadd.f32 0.0, %v1248
        %1250 = vdwg.mxu0
        %v1251 = vsub.f32 %v842, %v1204
        %v1252 = vsub.f32 %v844, %v1207
        %v1253 = vsub.f32 %v847, %v1210
        %v1254 = vsub.f32 %v849, %v1213
        %v1255 = vsub.f32 %v852, %v1216
        %v1256 = vsub.f32 %v854, %v1219
        %v1257 = vsub.f32 %v857, %v1222
        %v1258 = vsub.f32 %v859, %v1225
        %v1259 = vsub.f32 %v862, %v1228
        %v1260 = vsub.f32 %v864, %v1231
        %v1261 = vsub.f32 %v867, %v1234
        %v1262 = vsub.f32 %v869, %v1237
        %v1263 = vsub.f32 %v872, %v1240
        %v1264 = vsub.f32 %v874, %v1243
        %v1265 = vsub.f32 %v877, %v1246
        %v1266 = vsub.f32 %v879, %v1249
        %v1267 = vsel %vm1040, 1, 0
        %v1268 = vsel %vm1041, 1, 0
        %v1269 = vsel %vm1042, 1, 0
        %v1270 = vsel %vm1043, 1, 0
        %v1271 = vsel %vm1044, 1, 0
        %v1272 = vsel %vm1045, 1, 0
        %v1273 = vsel %vm1046, 1, 0
        %v1274 = vsel %vm1047, 1, 0
        %v1275 = vsel %vm1048, 1, 0
        %v1276 = vsel %vm1049, 1, 0
        %v1277 = vsel %vm1050, 1, 0
        %v1278 = vsel %vm1051, 1, 0
        %v1279 = vsel %vm1052, 1, 0
        %v1280 = vsel %vm1053, 1, 0
        %v1281 = vsel %vm1054, 1, 0
        %v1282 = vsel %vm1055, 1, 0
        %1283 = vset.pattern.permute.xlu0 0
        %1284 = vperm.xlu0 %1283, %v1267
        %v1285 = vpop.permute.xlu0 %1284
        %1286 = vset.pattern.permute.xlu0 0
        %1287 = vperm.xlu0 %1286, %v1268
        %v1288 = vpop.permute.xlu0 %1287
        %1289 = vset.pattern.permute.xlu0 0
        %1290 = vperm.xlu0 %1289, %v1269
        %v1291 = vpop.permute.xlu0 %1290
        %1292 = vset.pattern.permute.xlu0 0
        %1293 = vperm.xlu0 %1292, %v1270
        %v1294 = vpop.permute.xlu0 %1293
        %1295 = vset.pattern.permute.xlu0 0
        %1296 = vperm.xlu0 %1295, %v1271
        %v1297 = vpop.permute.xlu0 %1296
        %1298 = vset.pattern.permute.xlu0 0
        %1299 = vperm.xlu0 %1298, %v1272
        %v1300 = vpop.permute.xlu0 %1299
        %1301 = vset.pattern.permute.xlu0 0
        %1302 = vperm.xlu0 %1301, %v1273
        %v1303 = vpop.permute.xlu0 %1302
        %1304 = vset.pattern.permute.xlu0 0
        %1305 = vperm.xlu0 %1304, %v1274
        %v1306 = vpop.permute.xlu0 %1305
        %1307 = vset.pattern.permute.xlu0 0
        %1308 = vperm.xlu0 %1307, %v1275
        %v1309 = vpop.permute.xlu0 %1308
        %1310 = vset.pattern.permute.xlu0 0
        %1311 = vperm.xlu0 %1310, %v1276
        %v1312 = vpop.permute.xlu0 %1311
        %1313 = vset.pattern.permute.xlu0 0
        %1314 = vperm.xlu0 %1313, %v1277
        %v1315 = vpop.permute.xlu0 %1314
        %1316 = vset.pattern.permute.xlu0 0
        %1317 = vperm.xlu0 %1316, %v1278
        %v1318 = vpop.permute.xlu0 %1317
        %1319 = vset.pattern.permute.xlu0 0
        %1320 = vperm.xlu0 %1319, %v1279
        %v1321 = vpop.permute.xlu0 %1320
        %1322 = vset.pattern.permute.xlu0 0
        %1323 = vperm.xlu0 %1322, %v1280
        %v1324 = vpop.permute.xlu0 %1323
        %1325 = vset.pattern.permute.xlu0 0
        %1326 = vperm.xlu0 %1325, %v1281
        %v1327 = vpop.permute.xlu0 %1326
        %1328 = vset.pattern.permute.xlu0 0
        %1329 = vperm.xlu0 %1328, %v1282
        %v1330 = vpop.permute.xlu0 %1329
        %vm1331 = vcmp.eq.s32.totalorder %v1285, 1
        %vm1332 = vcmp.eq.s32.totalorder %v1288, 1
        %vm1333 = vcmp.eq.s32.totalorder %v1291, 1
        %vm1334 = vcmp.eq.s32.totalorder %v1294, 1
        %vm1335 = vcmp.eq.s32.totalorder %v1297, 1
        %vm1336 = vcmp.eq.s32.totalorder %v1300, 1
        %vm1337 = vcmp.eq.s32.totalorder %v1303, 1
        %vm1338 = vcmp.eq.s32.totalorder %v1306, 1
        %vm1339 = vcmp.eq.s32.totalorder %v1309, 1
        %vm1340 = vcmp.eq.s32.totalorder %v1312, 1
        %vm1341 = vcmp.eq.s32.totalorder %v1315, 1
        %vm1342 = vcmp.eq.s32.totalorder %v1318, 1
        %vm1343 = vcmp.eq.s32.totalorder %v1321, 1
        %vm1344 = vcmp.eq.s32.totalorder %v1324, 1
        %vm1345 = vcmp.eq.s32.totalorder %v1327, 1
        %vm1346 = vcmp.eq.s32.totalorder %v1330, 1
        %v1347 = vsel %vm1331, %v1251, -1e+30
        %v1348 = vsel %vm1332, %v1252, -1e+30
        %v1349 = vsel %vm1333, %v1253, -1e+30
        %v1350 = vsel %vm1334, %v1254, -1e+30
        %v1351 = vsel %vm1335, %v1255, -1e+30
        %v1352 = vsel %vm1336, %v1256, -1e+30
        %v1353 = vsel %vm1337, %v1257, -1e+30
        %v1354 = vsel %vm1338, %v1258, -1e+30
        %v1355 = vsel %vm1339, %v1259, -1e+30
        %v1356 = vsel %vm1340, %v1260, -1e+30
        %v1357 = vsel %vm1341, %v1261, -1e+30
        %v1358 = vsel %vm1342, %v1262, -1e+30
        %v1359 = vsel %vm1343, %v1263, -1e+30
        %v1360 = vsel %vm1344, %v1264, -1e+30
        %v1361 = vsel %vm1345, %v1265, -1e+30
        %v1362 = vsel %vm1346, %v1266, -1e+30
        %v1363 = vmul.f32 %v1347, 1.442695
        %v1364 = vpow.pop %v1363
        %v1365 = vmul.f32 %v1348, 1.442695
        %v1366 = vpow.pop %v1365
        %v1367 = vmul.f32 %v1349, 1.442695
        %v1368 = vpow.pop %v1367
        %v1369 = vmul.f32 %v1350, 1.442695
        %v1370 = vpow.pop %v1369
        %v1371 = vmul.f32 %v1351, 1.442695
        %v1372 = vpow.pop %v1371
        %v1373 = vmul.f32 %v1352, 1.442695
        %v1374 = vpow.pop %v1373
        %v1375 = vmul.f32 %v1353, 1.442695
        %v1376 = vpow.pop %v1375
        %v1377 = vmul.f32 %v1354, 1.442695
        %v1378 = vpow.pop %v1377
        %v1379 = vmul.f32 %v1355, 1.442695
        %v1380 = vpow.pop %v1379
        %v1381 = vmul.f32 %v1356, 1.442695
        %v1382 = vpow.pop %v1381
        %v1383 = vmul.f32 %v1357, 1.442695
        %v1384 = vpow.pop %v1383
        %v1385 = vmul.f32 %v1358, 1.442695
        %v1386 = vpow.pop %v1385
        %v1387 = vmul.f32 %v1359, 1.442695
        %v1388 = vpow.pop %v1387
        %v1389 = vmul.f32 %v1360, 1.442695
        %v1390 = vpow.pop %v1389
        %v1391 = vmul.f32 %v1361, 1.442695
        %v1392 = vpow.pop %v1391
        %v1393 = vmul.f32 %v1362, 1.442695
        %v1394 = vpow.pop %v1393
        %1396 = vset.pattern.permute.xlu0 0
        %1397 = vperm.xlu0 %1396, %v1364
        %v1398 = vpop.permute.xlu0 %1397
        %1401 = vset.pattern.permute.xlu0 0
        %1402 = vperm.xlu0 %1401, %v1366
        %v1403 = vpop.permute.xlu0 %1402
        %1406 = vset.pattern.permute.xlu0 0
        %1407 = vperm.xlu0 %1406, %v1368
        %v1408 = vpop.permute.xlu0 %1407
        %1411 = vset.pattern.permute.xlu0 0
        %1412 = vperm.xlu0 %1411, %v1370
        %v1413 = vpop.permute.xlu0 %1412
        %1416 = vset.pattern.permute.xlu0 0
        %1417 = vperm.xlu0 %1416, %v1372
        %v1418 = vpop.permute.xlu0 %1417
        %1421 = vset.pattern.permute.xlu0 0
        %1422 = vperm.xlu0 %1421, %v1374
        %v1423 = vpop.permute.xlu0 %1422
        %1426 = vset.pattern.permute.xlu0 0
        %1427 = vperm.xlu0 %1426, %v1376
        %v1428 = vpop.permute.xlu0 %1427
        %1431 = vset.pattern.permute.xlu0 0
        %1432 = vperm.xlu0 %1431, %v1378
        %v1433 = vpop.permute.xlu0 %1432
        %1436 = vset.pattern.permute.xlu0 0
        %1437 = vperm.xlu0 %1436, %v1380
        %v1438 = vpop.permute.xlu0 %1437
        %1441 = vset.pattern.permute.xlu0 0
        %1442 = vperm.xlu0 %1441, %v1382
        %v1443 = vpop.permute.xlu0 %1442
        %1446 = vset.pattern.permute.xlu0 0
        %1447 = vperm.xlu0 %1446, %v1384
        %v1448 = vpop.permute.xlu0 %1447
        %1451 = vset.pattern.permute.xlu0 0
        %1452 = vperm.xlu0 %1451, %v1386
        %v1453 = vpop.permute.xlu0 %1452
        %1456 = vset.pattern.permute.xlu0 0
        %1457 = vperm.xlu0 %1456, %v1388
        %v1458 = vpop.permute.xlu0 %1457
        %1461 = vset.pattern.permute.xlu0 0
        %1462 = vperm.xlu0 %1461, %v1390
        %v1463 = vpop.permute.xlu0 %1462
        %1466 = vset.pattern.permute.xlu0 0
        %1467 = vperm.xlu0 %1466, %v1392
        %v1468 = vpop.permute.xlu0 %1467
        %1471 = vset.pattern.permute.xlu0 0
        %1472 = vperm.xlu0 %1471, %v1394
        %v1473 = vpop.permute.xlu0 %1472
        %1475 = vset.pattern.permute.xlu0 1
        %1476 = vperm.xlu0 %1475, %v1364
        %v1477 = vpop.permute.xlu0 %1476
        %1479 = vset.pattern.permute.xlu0 1
        %1480 = vperm.xlu0 %1479, %v1366
        %v1481 = vpop.permute.xlu0 %1480
        %1483 = vset.pattern.permute.xlu0 1
        %1484 = vperm.xlu0 %1483, %v1368
        %v1485 = vpop.permute.xlu0 %1484
        %1487 = vset.pattern.permute.xlu0 1
        %1488 = vperm.xlu0 %1487, %v1370
        %v1489 = vpop.permute.xlu0 %1488
        %1491 = vset.pattern.permute.xlu0 1
        %1492 = vperm.xlu0 %1491, %v1372
        %v1493 = vpop.permute.xlu0 %1492
        %1495 = vset.pattern.permute.xlu0 1
        %1496 = vperm.xlu0 %1495, %v1374
        %v1497 = vpop.permute.xlu0 %1496
        %1499 = vset.pattern.permute.xlu0 1
        %1500 = vperm.xlu0 %1499, %v1376
        %v1501 = vpop.permute.xlu0 %1500
        %1503 = vset.pattern.permute.xlu0 1
        %1504 = vperm.xlu0 %1503, %v1378
        %v1505 = vpop.permute.xlu0 %1504
        %1507 = vset.pattern.permute.xlu0 1
        %1508 = vperm.xlu0 %1507, %v1380
        %v1509 = vpop.permute.xlu0 %1508
        %1511 = vset.pattern.permute.xlu0 1
        %1512 = vperm.xlu0 %1511, %v1382
        %v1513 = vpop.permute.xlu0 %1512
        %1515 = vset.pattern.permute.xlu0 1
        %1516 = vperm.xlu0 %1515, %v1384
        %v1517 = vpop.permute.xlu0 %1516
        %1519 = vset.pattern.permute.xlu0 1
        %1520 = vperm.xlu0 %1519, %v1386
        %v1521 = vpop.permute.xlu0 %1520
        %1523 = vset.pattern.permute.xlu0 1
        %1524 = vperm.xlu0 %1523, %v1388
        %v1525 = vpop.permute.xlu0 %1524
        %1527 = vset.pattern.permute.xlu0 1
        %1528 = vperm.xlu0 %1527, %v1390
        %v1529 = vpop.permute.xlu0 %1528
        %1531 = vset.pattern.permute.xlu0 1
        %1532 = vperm.xlu0 %1531, %v1392
        %v1533 = vpop.permute.xlu0 %1532
        %1535 = vset.pattern.permute.xlu0 1
        %1536 = vperm.xlu0 %1535, %v1394
        %v1537 = vpop.permute.xlu0 %1536
        %1539 = vset.pattern.permute.xlu0 2
        %1540 = vperm.xlu0 %1539, %v1364
        %v1541 = vpop.permute.xlu0 %1540
        %1543 = vset.pattern.permute.xlu0 2
        %1544 = vperm.xlu0 %1543, %v1366
        %v1545 = vpop.permute.xlu0 %1544
        %1547 = vset.pattern.permute.xlu0 2
        %1548 = vperm.xlu0 %1547, %v1368
        %v1549 = vpop.permute.xlu0 %1548
        %1551 = vset.pattern.permute.xlu0 2
        %1552 = vperm.xlu0 %1551, %v1370
        %v1553 = vpop.permute.xlu0 %1552
        %1555 = vset.pattern.permute.xlu0 2
        %1556 = vperm.xlu0 %1555, %v1372
        %v1557 = vpop.permute.xlu0 %1556
        %1559 = vset.pattern.permute.xlu0 2
        %1560 = vperm.xlu0 %1559, %v1374
        %v1561 = vpop.permute.xlu0 %1560
        %1563 = vset.pattern.permute.xlu0 2
        %1564 = vperm.xlu0 %1563, %v1376
        %v1565 = vpop.permute.xlu0 %1564
        %1567 = vset.pattern.permute.xlu0 2
        %1568 = vperm.xlu0 %1567, %v1378
        %v1569 = vpop.permute.xlu0 %1568
        %1571 = vset.pattern.permute.xlu0 2
        %1572 = vperm.xlu0 %1571, %v1380
        %v1573 = vpop.permute.xlu0 %1572
        %1575 = vset.pattern.permute.xlu0 2
        %1576 = vperm.xlu0 %1575, %v1382
        %v1577 = vpop.permute.xlu0 %1576
        %1579 = vset.pattern.permute.xlu0 2
        %1580 = vperm.xlu0 %1579, %v1384
        %v1581 = vpop.permute.xlu0 %1580
        %1583 = vset.pattern.permute.xlu0 2
        %1584 = vperm.xlu0 %1583, %v1386
        %v1585 = vpop.permute.xlu0 %1584
        %1587 = vset.pattern.permute.xlu0 2
        %1588 = vperm.xlu0 %1587, %v1388
        %v1589 = vpop.permute.xlu0 %1588
        %1591 = vset.pattern.permute.xlu0 2
        %1592 = vperm.xlu0 %1591, %v1390
        %v1593 = vpop.permute.xlu0 %1592
        %1595 = vset.pattern.permute.xlu0 2
        %1596 = vperm.xlu0 %1595, %v1392
        %v1597 = vpop.permute.xlu0 %1596
        %1599 = vset.pattern.permute.xlu0 2
        %1600 = vperm.xlu0 %1599, %v1394
        %v1601 = vpop.permute.xlu0 %1600
        %1603 = vset.pattern.permute.xlu0 3
        %1604 = vperm.xlu0 %1603, %v1364
        %v1605 = vpop.permute.xlu0 %1604
        %1607 = vset.pattern.permute.xlu0 3
        %1608 = vperm.xlu0 %1607, %v1366
        %v1609 = vpop.permute.xlu0 %1608
        %1611 = vset.pattern.permute.xlu0 3
        %1612 = vperm.xlu0 %1611, %v1368
        %v1613 = vpop.permute.xlu0 %1612
        %1615 = vset.pattern.permute.xlu0 3
        %1616 = vperm.xlu0 %1615, %v1370
        %v1617 = vpop.permute.xlu0 %1616
        %1619 = vset.pattern.permute.xlu0 3
        %1620 = vperm.xlu0 %1619, %v1372
        %v1621 = vpop.permute.xlu0 %1620
        %1623 = vset.pattern.permute.xlu0 3
        %1624 = vperm.xlu0 %1623, %v1374
        %v1625 = vpop.permute.xlu0 %1624
        %1627 = vset.pattern.permute.xlu0 3
        %1628 = vperm.xlu0 %1627, %v1376
        %v1629 = vpop.permute.xlu0 %1628
        %1631 = vset.pattern.permute.xlu0 3
        %1632 = vperm.xlu0 %1631, %v1378
        %v1633 = vpop.permute.xlu0 %1632
        %1635 = vset.pattern.permute.xlu0 3
        %1636 = vperm.xlu0 %1635, %v1380
        %v1637 = vpop.permute.xlu0 %1636
        %1639 = vset.pattern.permute.xlu0 3
        %1640 = vperm.xlu0 %1639, %v1382
        %v1641 = vpop.permute.xlu0 %1640
        %1643 = vset.pattern.permute.xlu0 3
        %1644 = vperm.xlu0 %1643, %v1384
        %v1645 = vpop.permute.xlu0 %1644
        %1647 = vset.pattern.permute.xlu0 3
        %1648 = vperm.xlu0 %1647, %v1386
        %v1649 = vpop.permute.xlu0 %1648
        %1651 = vset.pattern.permute.xlu0 3
        %1652 = vperm.xlu0 %1651, %v1388
        %v1653 = vpop.permute.xlu0 %1652
        %1655 = vset.pattern.permute.xlu0 3
        %1656 = vperm.xlu0 %1655, %v1390
        %v1657 = vpop.permute.xlu0 %1656
        %1659 = vset.pattern.permute.xlu0 3
        %1660 = vperm.xlu0 %1659, %v1392
        %v1661 = vpop.permute.xlu0 %1660
        %1663 = vset.pattern.permute.xlu0 3
        %1664 = vperm.xlu0 %1663, %v1394
        %v1665 = vpop.permute.xlu0 %1664
        %v1667 = vsel %vm598, %v1398, %v1477
        %v1668 = vsel %vm598, %v1403, %v1481
        %v1669 = vsel %vm598, %v1408, %v1485
        %v1670 = vsel %vm598, %v1413, %v1489
        %v1671 = vsel %vm598, %v1418, %v1493
        %v1672 = vsel %vm598, %v1423, %v1497
        %v1673 = vsel %vm598, %v1428, %v1501
        %v1674 = vsel %vm598, %v1433, %v1505
        %v1675 = vsel %vm598, %v1438, %v1509
        %v1676 = vsel %vm598, %v1443, %v1513
        %v1677 = vsel %vm598, %v1448, %v1517
        %v1678 = vsel %vm598, %v1453, %v1521
        %v1679 = vsel %vm598, %v1458, %v1525
        %v1680 = vsel %vm598, %v1463, %v1529
        %v1681 = vsel %vm598, %v1468, %v1533
        %v1682 = vsel %vm598, %v1473, %v1537
        %v1683 = vsel %vm1133, %v1667, %v1541
        %v1684 = vsel %vm1133, %v1668, %v1545
        %v1685 = vsel %vm1133, %v1669, %v1549
        %v1686 = vsel %vm1133, %v1670, %v1553
        %v1687 = vsel %vm1133, %v1671, %v1557
        %v1688 = vsel %vm1133, %v1672, %v1561
        %v1689 = vsel %vm1133, %v1673, %v1565
        %v1690 = vsel %vm1133, %v1674, %v1569
        %v1691 = vsel %vm1133, %v1675, %v1573
        %v1692 = vsel %vm1133, %v1676, %v1577
        %v1693 = vsel %vm1133, %v1677, %v1581
        %v1694 = vsel %vm1133, %v1678, %v1585
        %v1695 = vsel %vm1133, %v1679, %v1589
        %v1696 = vsel %vm1133, %v1680, %v1593
        %v1697 = vsel %vm1133, %v1681, %v1597
        %v1698 = vsel %vm1133, %v1682, %v1601
        %v1699 = vsel %vm1135, %v1683, %v1605
        %v1700 = vsel %vm1135, %v1684, %v1609
        %v1701 = vsel %vm1135, %v1685, %v1613
        %v1702 = vsel %vm1135, %v1686, %v1617
        %v1703 = vsel %vm1135, %v1687, %v1621
        %v1704 = vsel %vm1135, %v1688, %v1625
        %v1705 = vsel %vm1135, %v1689, %v1629
        %v1706 = vsel %vm1135, %v1690, %v1633
        %v1707 = vsel %vm1135, %v1691, %v1637
        %v1708 = vsel %vm1135, %v1692, %v1641
        %v1709 = vsel %vm1135, %v1693, %v1645
        %v1710 = vsel %vm1135, %v1694, %v1649
        %v1711 = vsel %vm1135, %v1695, %v1653
        %v1712 = vsel %vm1135, %v1696, %v1657
        %v1713 = vsel %vm1135, %v1697, %v1661
        %v1714 = vsel %vm1135, %v1698, %v1665
        %v1715 = vmul.f32 %v676, %v1699
        %v1716 = vmul.f32 %v677, %v1700
        %v1717 = vmul.f32 %v678, %v1701
        %v1718 = vmul.f32 %v679, %v1702
        %v1719 = vmul.f32 %v680, %v1703
        %v1720 = vmul.f32 %v681, %v1704
        %v1721 = vmul.f32 %v682, %v1705
        %v1722 = vmul.f32 %v683, %v1706
        %v1723 = vmul.f32 %v684, %v1707
        %v1724 = vmul.f32 %v685, %v1708
        %v1725 = vmul.f32 %v686, %v1709
        %v1726 = vmul.f32 %v687, %v1710
        %v1727 = vmul.f32 %v688, %v1711
        %v1728 = vmul.f32 %v689, %v1712
        %v1729 = vmul.f32 %v690, %v1713
        %v1730 = vmul.f32 %v691, %v1714
        %v1731 = vpack.c.bf16 %v1716, %v1715
        %v1732 = vpack.c.bf16 %v1700, %v1699
        %v1733 = vpack.c.bf16 %v1718, %v1717
        %v1734 = vpack.c.bf16 %v1702, %v1701
        %v1735 = vpack.c.bf16 %v1720, %v1719
        %v1736 = vpack.c.bf16 %v1704, %v1703
        %v1737 = vpack.c.bf16 %v1722, %v1721
        %v1738 = vpack.c.bf16 %v1706, %v1705
        %v1739 = vpack.c.bf16 %v1724, %v1723
        %v1740 = vpack.c.bf16 %v1708, %v1707
        %v1741 = vpack.c.bf16 %v1726, %v1725
        %v1742 = vpack.c.bf16 %v1710, %v1709
        %v1743 = vpack.c.bf16 %v1728, %v1727
        %v1744 = vpack.c.bf16 %v1712, %v1711
        %v1745 = vpack.c.bf16 %v1730, %v1729
        %v1746 = vpack.c.bf16 %v1714, %v1713
        %1747 = vmatpush.bf16.msra.mxu0 %v1745
        %1748 = vmatpush.bf16.msra.mxu0 %v1743
        %1749 = vmatpush.bf16.msra.mxu0 %v1741
        %1750 = vmatpush.bf16.msra.mxu0 %v1739
        %1751 = vmatpush.bf16.msra.mxu0 %v1737
        %1752 = vmatpush.bf16.msra.mxu0 %v1735
        %1753 = vmatpush.bf16.msra.mxu0 %v1733
        %1754 = vmatpush.bf16.msra.mxu0 %v1731
        %1755 = vmatmul.bf16.gmra.mxu0 %v973
        %v1756 = vpop.f32.mrf.mxu0
        %v1757 = vadd.f32 0.0, %v1756
        %v1758 = vpop.f32.mrf.mxu0
        %1759 = vdwg.mxu0
        %1760 = vmatpush.bf16.msra.mxu0 %v1746
        %1761 = vmatpush.bf16.msra.mxu0 %v1744
        %1762 = vmatpush.bf16.msra.mxu0 %v1742
        %1763 = vmatpush.bf16.msra.mxu0 %v1740
        %1764 = vmatpush.bf16.msra.mxu0 %v1738
        %1765 = vmatpush.bf16.msra.mxu0 %v1736
        %1766 = vmatpush.bf16.msra.mxu0 %v1734
        %1767 = vmatpush.bf16.msra.mxu0 %v1732
        %1768 = vmatmul.bf16.gmra.mxu0 %v973
        %v1769 = vpop.f32.mrf.mxu0
        %v1770 = vadd.f32 0.0, %v1769
        %v1771 = vpop.f32.mrf.mxu0
        %1772 = vdwg.mxu0
        %v1773 = vld [vmem:[#allocation4] sm:$0xff]
        %v1774 = vmul.f32 %v1773, %v1136
        %v1775 = vadd.f32 %v1774, %v1757
        %1776 = vst [vmem:[#allocation4] sm:$0xff] %v1775
        %v1777 = vld [vmem:[#allocation3] sm:$0xff]
        %v1778 = vmul.f32 %v1777, %v1136
        %v1779 = vadd.f32 %v1778, %v1770
        %1780 = vst [vmem:[#allocation3] sm:$0xff] %v1779
        %vm1781 = vcmask 31744
        %1782 = vst.msk [vmem:[#allocation2] sm:$0xff] %vm1781, %v1111
        %p1783 = scmp.eq.s32.totalorder %s33, 1
        // Predicated region
        $region81: #{tpu_custom_call.1} parent=75 // pred_check
          %p1784 = pneg %p1783
        $region82: #{tpu_custom_call.1} parent=75 // pred_check_branch
          %1786 = sbr.rel (%p1784) target = $region84
        $region83: #{tpu_custom_call.1} parent=75 // pred_region
          %v1787 = vld [vmem:[#allocation3] sm:$0xff]
          %vm1788 = vcmp.gt.f32.partialorder %v1787, 0.0
          %v1789 = vsel %vm1788, %v1787, 1.0
          %v1790 = vrcp.pop %v1789
          %v1791 = vld [vmem:[#allocation4] sm:$0xff]
          %v1792 = vmul.f32 %v1791, %v1790
          %v1793 = vsel %vm1788, %v1792, 0.0
          %v1794 = vld [vmem:[%s7] sm:$0x1]
          %v1796 = vperm.slane %v1794, 0
          %v1798 = vadd.f32 %v1793, %v1796
          %v1799 = vpack.c.bf16 %v1798, %v1798
          %v1800 = vld [vmem:[%s8] sm:$0xf]
          %v1801 = vld [vmem:[%s8 + $0x4] sm:$0xf]
          %v1802 = vld [vmem:[%s8 + $0x8] sm:$0xf]
          %v1803 = vld [vmem:[%s8 + $0xc] sm:$0xf]
          %v1804 = vld [vmem:[%s8 + $0x10] sm:$0xf]
          %v1805 = vld [vmem:[%s8 + $0x14] sm:$0xf]
          %v1806 = vld [vmem:[%s8 + $0x18] sm:$0xf]
          %v1807 = vld [vmem:[%s8 + $0x1c] sm:$0xf]
          %v1808 = vld [vmem:[%s8 + $0x20] sm:$0xf]
          %v1809 = vld [vmem:[%s8 + $0x24] sm:$0xf]
          %v1810 = vld [vmem:[%s8 + $0x28] sm:$0xf]
          %v1811 = vld [vmem:[%s8 + $0x2c] sm:$0xf]
          %v1812 = vld [vmem:[%s8 + $0x30] sm:$0xf]
          %v1813 = vld [vmem:[%s8 + $0x34] sm:$0xf]
          %v1814 = vld [vmem:[%s8 + $0x38] sm:$0xf]
          %v1815 = vld [vmem:[%s8 + $0x3c] sm:$0xf]
          %v1816 = vld [vmem:[%s9] sm:$0x1]
          %v1818 = vperm.slane %v1816, 0
          %v1836 = vunpack.c.l.b16 %v1800
          %v1837 = vunpack.c.l.b16 %v1801
          %v1838 = vunpack.c.l.b16 %v1802
          %v1839 = vunpack.c.l.b16 %v1803
          %v1840 = vunpack.c.l.b16 %v1804
          %v1841 = vunpack.c.l.b16 %v1805
          %v1842 = vunpack.c.l.b16 %v1806
          %v1843 = vunpack.c.l.b16 %v1807
          %v1844 = vunpack.c.l.b16 %v1808
          %v1845 = vunpack.c.l.b16 %v1809
          %v1846 = vunpack.c.l.b16 %v1810
          %v1847 = vunpack.c.l.b16 %v1811
          %v1848 = vunpack.c.l.b16 %v1812
          %v1849 = vunpack.c.l.b16 %v1813
          %v1850 = vunpack.c.l.b16 %v1814
          %v1851 = vunpack.c.l.b16 %v1815
          %v1852 = vpack.c.b16 %v1837, %v1836
          %v1853 = vpack.c.b16 %v1839, %v1838
          %v1854 = vpack.c.b16 %v1841, %v1840
          %v1855 = vpack.c.b16 %v1843, %v1842
          %v1856 = vpack.c.b16 %v1845, %v1844
          %v1857 = vpack.c.b16 %v1847, %v1846
          %v1858 = vpack.c.b16 %v1849, %v1848
          %v1859 = vpack.c.b16 %v1851, %v1850
          %1868 = vmatpush.bf16.msra.mxu0 %v1859
          %1869 = vmatpush.bf16.msra.mxu0 %v1858
          %1870 = vmatpush.bf16.msra.mxu0 %v1857
          %1871 = vmatpush.bf16.msra.mxu0 %v1856
          %1872 = vmatpush.bf16.msra.mxu0 %v1855
          %1873 = vmatpush.bf16.msra.mxu0 %v1854
          %1874 = vmatpush.bf16.msra.mxu0 %v1853
          %1875 = vmatpush.bf16.msra.mxu0 %v1852
          %1876 = vmatmul.bf16.gmra.mxu0 %v1799
          %v1877 = vpop.f32.mrf.mxu0
          %v1878 = vadd.f32 %v1818, %v1877
          %v1879 = vpop.f32.mrf.mxu0
          %1880 = vdwg.mxu0
          %1881 = vadd.xlane.f32.xlu0 %v1878
          %v1882 = vpop.xlane.xlu0 %1881
          %v1883 = vrcp.pop 128.0
          %v1884 = vmul.f32 128.0, %v1883
          %v1885 = vsub.f32 1.0, %v1884
          %v1886 = vmul.f32 %v1883, %v1885
          %v1887 = vadd.f32 %v1883, %v1886
          %vm1888 = vweird.f32 %v1883
          %v1889 = vsel %vm1888, %v1883, %v1887
          %v1890 = vmul.f32 %v1882, %v1889
          %v1891 = vsub.f32 %v1878, %v1890
          %v1892 = vmul.f32 %v1891, %v1891
          %1893 = vadd.xlane.f32.xlu0 %v1892
          %v1894 = vpop.xlane.xlu0 %1893
          %v1895 = vmul.f32 %v1894, %v1889
          %v1896 = vadd.f32 %v1895, 1e-05
          %v1897 = vrsqrt.pop %v1896
          %v1898 = vmul.f32 %v1897, %v1896
          %v1899 = vmul.f32 %v1898, %v1897
          %v1900 = vmul.f32 0.5, %v1899
          %v1901 = vsub.f32 1.5, %v1900
          %v1902 = vmul.f32 %v1897, %v1901
          %vm1903 = vweird.f32 %v1896
          %vm1904 = vweird.f32 %v1897
          %vm1905 = vmor %vm1903, %vm1904
          %v1906 = vsel %vm1905, %v1897, %v1902
          %v1907 = vmul.f32 %v1891, %v1906
          %v1908 = vld [vmem:[%s10] sm:$0x1]
          %v1910 = vperm.slane %v1908, 0
          %v1912 = vmul.f32 %v1907, %v1910
          %v1913 = vld [vmem:[%s11] sm:$0x1]
          %v1915 = vperm.slane %v1913, 0
          %v1917 = vadd.f32 %v1912, %v1915
          %v1918 = vmul.f32 %v1917, %v1917
          %v1919 = vmul.f32 %v1917, %v1918
          %v1920 = vmul.f32 %v1919, 0.044715
          %v1921 = vadd.f32 %v1917, %v1920
          %v1922 = vmul.f32 %v1921, 0.7978846
          %v1923 = vtanh.pop %v1922
          %v1924 = vadd.f32 %v1923, 1.0
          %v1925 = vmul.f32 %v1924, 0.5
          %v1926 = vmul.f32 %v1917, %v1925
          %v1927 = vpack.c.bf16 %v1926, %v1926
          %v1928 = vld [vmem:[%s12] sm:$0xf]
          %v1929 = vld [vmem:[%s12 + $0x4] sm:$0xf]
          %v1930 = vld [vmem:[%s12 + $0x8] sm:$0xf]
          %v1931 = vld [vmem:[%s12 + $0xc] sm:$0xf]
          %v1932 = vld [vmem:[%s12 + $0x10] sm:$0xf]
          %v1933 = vld [vmem:[%s12 + $0x14] sm:$0xf]
          %v1934 = vld [vmem:[%s12 + $0x18] sm:$0xf]
          %v1935 = vld [vmem:[%s12 + $0x1c] sm:$0xf]
          %v1936 = vld [vmem:[%s12 + $0x20] sm:$0xf]
          %v1937 = vld [vmem:[%s12 + $0x24] sm:$0xf]
          %v1938 = vld [vmem:[%s12 + $0x28] sm:$0xf]
          %v1939 = vld [vmem:[%s12 + $0x2c] sm:$0xf]
          %v1940 = vld [vmem:[%s12 + $0x30] sm:$0xf]
          %v1941 = vld [vmem:[%s12 + $0x34] sm:$0xf]
          %v1942 = vld [vmem:[%s12 + $0x38] sm:$0xf]
          %v1943 = vld [vmem:[%s12 + $0x3c] sm:$0xf]
          %v1944 = vld [vmem:[%s13] sm:$0x1]
          %v1946 = vperm.slane %v1944, 0
          %v1964 = vunpack.c.l.b16 %v1928
          %v1965 = vunpack.c.l.b16 %v1929
          %v1966 = vunpack.c.l.b16 %v1930
          %v1967 = vunpack.c.l.b16 %v1931
          %v1968 = vunpack.c.l.b16 %v1932
          %v1969 = vunpack.c.l.b16 %v1933
          %v1970 = vunpack.c.l.b16 %v1934
          %v1971 = vunpack.c.l.b16 %v1935
          %v1972 = vunpack.c.l.b16 %v1936
          %v1973 = vunpack.c.l.b16 %v1937
          %v1974 = vunpack.c.l.b16 %v1938
          %v1975 = vunpack.c.l.b16 %v1939
          %v1976 = vunpack.c.l.b16 %v1940
          %v1977 = vunpack.c.l.b16 %v1941
          %v1978 = vunpack.c.l.b16 %v1942
          %v1979 = vunpack.c.l.b16 %v1943
          %v1980 = vpack.c.b16 %v1965, %v1964
          %v1981 = vpack.c.b16 %v1967, %v1966
          %v1982 = vpack.c.b16 %v1969, %v1968
          %v1983 = vpack.c.b16 %v1971, %v1970
          %v1984 = vpack.c.b16 %v1973, %v1972
          %v1985 = vpack.c.b16 %v1975, %v1974
          %v1986 = vpack.c.b16 %v1977, %v1976
          %v1987 = vpack.c.b16 %v1979, %v1978
          %1996 = vmatpush.bf16.msra.mxu0 %v1987
          %1997 = vmatpush.bf16.msra.mxu0 %v1986
          %1998 = vmatpush.bf16.msra.mxu0 %v1985
          %1999 = vmatpush.bf16.msra.mxu0 %v1984
          %2000 = vmatpush.bf16.msra.mxu0 %v1983
          %2001 = vmatpush.bf16.msra.mxu0 %v1982
          %2002 = vmatpush.bf16.msra.mxu0 %v1981
          %2003 = vmatpush.bf16.msra.mxu0 %v1980
          %2004 = vmatmul.bf16.gmra.mxu0 %v1927
          %v2005 = vpop.f32.mrf.mxu0
          %v2006 = vadd.f32 %v1946, %v2005
          %v2007 = vpop.f32.mrf.mxu0
          %2008 = vdwg.mxu0
          %2009 = vst.msk [vmem:[%s500] sm:$0xff] %vm598, %v2006
        $region84: #{tpu_custom_call.1} parent=75 // pred_fallthru
          _
        %s2010 = sand.u32 %s357, 1
        %s2011 = scalar_lea.sflag [#allocation6], %s2010
        %s2012 = sand.u32 %s357, 1
        %s2013 = smul.addr %s2012, 8
        %s2014 = scalar_lea.vmem [#allocation5], %s2013
        // Predicated region
        $region85: #{tpu_custom_call.1} parent=75 // pred_check
          %p2015 = pneg %p367
        $region86: #{tpu_custom_call.1} parent=75 // pred_check_branch
          %2017 = sbr.rel (%p2015) target = $region88
        $region87: #{tpu_custom_call.1} parent=75 // pred_region
          %2019 = vsyncadd %s2011, 0
          %s2020 = smul.addr %s32, 8
          %s2021 = scalar_lea.hbm %s14, %s2020
          %s2023 = sshll.u32 %s2014, 4
          %s2024 = int_to_ptr.vmem [resolvable:$true] %s2023
          %s2025 = sshll.u32 %s2021, 4
          %s2026 = int_to_ptr.hbm [resolvable:$true] %s2025
          %2028 = dma.vmem_to_hbm [thread:$0]  %s2024, 128, %s2026, %s2011
        $region88: #{tpu_custom_call.1} parent=75 // pred_fallthru
          _
      $region76: #{tpu_custom_call.1} parent=5 // pred_fallthru
        _
      %p2029 = scmp.le.s32.totalorder 2, %s23
      // Predicated region
      $region89: #{tpu_custom_call.1} parent=5 // pred_check
        %p2030 = pneg %p2029
      $region90: #{tpu_custom_call.1} parent=5 // pred_check_branch
        %2032 = sbr.rel (%p2030) target = $region92
      $region91: #{tpu_custom_call.1} parent=5 // pred_region
        %s2033 = ssub.s32 %s23, 2
        // Predicated region
        $region93: #{tpu_custom_call.1} parent=91 // pred_check
          %p2034 = pneg %p373
        $region94: #{tpu_custom_call.1} parent=91 // pred_check_branch
          %2036 = sbr.rel (%p2034) target = $region96
        $region95: #{tpu_custom_call.1} parent=91 // pred_region
          %s2037 = sand.u32 %s358, 1
          %s2038 = scalar_lea.sflag [#allocation6], %s2037
          %s2039 = sand.u32 %s358, 1
          %s2040 = smul.addr %s2039, 8
          %s2041 = scalar_lea.vmem [#allocation5], %s2040
          %2043 = dma.done %s2038, 128
        $region96: #{tpu_custom_call.1} parent=91 // pred_fallthru
          _
      $region92: #{tpu_custom_call.1} parent=5 // pred_fallthru
        _
    $region6: #{tpu_custom_call.1} parent=1 // loop_footer
      %s27 = sadd.s32 1, %s23
    $region7: #{tpu_custom_call.1} parent=1 // loop_footer_branch
      %22 = sbr.rel target = $region3
    $region8: #{tpu_custom_call.1} parent=1 // loop_exit
      _
    %2044 = vsyncpa [#allocation6], 1
    %s2045 = scalar_lea.sflag [#allocation6], 1
    %2046 = vsyncpa %s2045, 1

</llo_original>
